<compile_context>
chip_gen: v6e
topology: v6e:2x2x1
jax: 0.10.0
libtpu: 0.0.40
codegen_flags: <defaults>
</compile_context>

<pallas_src>
import jax
import jax.numpy as jnp
from jax.experimental import pallas as pl
from jax.experimental.pallas import tpu as pltpu

FEAT = 2048       # resnet50 backbone output width
EMB_DIM = 512     # EmbNet default `dim`
BN_EPS = 1e-5     # nn.BatchNorm1d default
NORM_EPS = 1e-12  # F.normalize default


def _round_up(x, m):
    return ((x + m - 1) // m) * m


# ---------------------------------------------------------------------------
# Pallas kernel: fused  (BN-folded) Linear  +  bias  +  L2-normalize(dim=1)
# Grid tiles the batch axis only; the bf16 fused weight block is the full
# (K, dim) matrix with a constant index_map, so it is DMA'd once and stays
# resident in VMEM across all batch tiles.
# ---------------------------------------------------------------------------
def embnet_head_kernel(feat_ref, w_ref, bias_ref, out_ref):
    # Features arrive f32; cast to bf16 for the MXU (weights already bf16),
    # accumulate in f32.
    f = feat_ref[...].astype(jnp.bfloat16)                       # (tb, K)
    y = jnp.dot(f, w_ref[...], preferred_element_type=jnp.float32)  # (tb, dim)
    y = y + bias_ref[...]                                        # folded-BN bias

    # F.normalize(dim=1): y / max(||y||_2, eps)
    norm = jnp.sqrt(jnp.sum(y * y, axis=1, keepdims=True))
    out_ref[...] = (y / jnp.maximum(norm, NORM_EPS)).astype(out_ref.dtype)


def embnet_head(feat, gamma, beta, run_mean, run_var, w, *, tb=128):
    """feat: (B, 2048) f32; w: (2048, dim) f32 (PyTorch fc.weight transposed)."""
    B, K = feat.shape
    dim = w.shape[1]

    # ---- Fold eval-mode BatchNorm1d into the linear layer (wrapper side) ----
    #   bn(x)      = (x - mean) * scale + beta,  scale = gamma * rsqrt(var+eps)
    #   fc(bn(x))  = x @ (scale[:,None] * W)  +  (beta - mean*scale) @ W
    scale = gamma * jax.lax.rsqrt(run_var + BN_EPS)              # (K,)
    shift = beta - run_mean * scale                              # (K,)
    w_fused = (scale[:, None] * w).astype(jnp.bfloat16)          # (K, dim) bf16
    bias = (shift @ w).reshape(1, dim).astype(jnp.float32)       # (1, dim) f32

    # ---- Batch tiling: pad B so the feature tile satisfies the (8,128) rule.
    tb = min(tb, _round_up(B, 8))
    Bp = _round_up(B, tb)
    if Bp != B:
        feat = jnp.pad(feat, ((0, Bp - B), (0, 0)))

    cost = pl.CostEstimate(
        flops=2 * Bp * K * dim,
        transcendentals=0,
        bytes_accessed=Bp * K * 4 + K * dim * 2 + dim * 4 + Bp * dim * 4,
    )

    out = pl.pallas_call(
        embnet_head_kernel,
        out_shape=jax.ShapeDtypeStruct((Bp, dim), jnp.float32),
        grid_spec=pl.GridSpec(
            grid=(Bp // tb,),
            in_specs=[
                pl.BlockSpec((tb, K), lambda b: (b, 0)),    # feature tile
                pl.BlockSpec((K, dim), lambda b: (0, 0)),   # resident fused W
                pl.BlockSpec((1, dim), lambda b: (0, 0)),   # folded-BN bias
            ],
            out_specs=pl.BlockSpec((tb, dim), lambda b: (b, 0)),
        ),
        compiler_params=pltpu.CompilerParams(
            dimension_semantics=("parallel",)),
        cost_estimate=cost,
    )(feat, w_fused, bias)
    return out[:B]


# ---------------------------------------------------------------------------
# Backbone stand-in (glue, plain JAX).
# TODO(synk): the pretrained torchvision resnet50 (IMAGENET1K_V1 weights) has
# no clean in-script Pallas equivalent; replaced by a deterministic stand-in
# that reproduces its interface: NCHW image -> non-negative 2048-d feature.
# ---------------------------------------------------------------------------
def standin_backbone(x_nchw, w_bb):
    B = x_nchw.shape[0]
    flat = x_nchw.reshape(B, -1)                     # (B, C*H*W)
    return jnp.maximum(flat @ w_bb, 0.0)             # (B, 2048), post-ReLU-like


# Pure-JAX references for correctness checks.
def head_ref_f32(feat, gamma, beta, run_mean, run_var, w):
    z = (feat - run_mean) / jnp.sqrt(run_var + BN_EPS) * gamma + beta
    y = z @ w
    n = jnp.sqrt(jnp.sum(y * y, axis=1, keepdims=True))
    return y / jnp.maximum(n, NORM_EPS)


def head_ref_bf16(feat, gamma, beta, run_mean, run_var, w):
    # Mirrors the kernel's arithmetic (BN folded, bf16 matmul, f32 accum).
    scale = gamma * jax.lax.rsqrt(run_var + BN_EPS)
    shift = beta - run_mean * scale
    wf = (scale[:, None] * w).astype(jnp.bfloat16)
    bias = (shift @ w).reshape(1, -1)
    y = jnp.dot(feat.astype(jnp.bfloat16), wf,
                preferred_element_type=jnp.float32) + bias
    n = jnp.sqrt(jnp.sum(y * y, axis=1, keepdims=True))
    return y / jnp.maximum(n, NORM_EPS)


if __name__ == "__main__":
    key = jax.random.PRNGKey(0)
    k_x, k_bb, k_g, k_b, k_m, k_v, k_w = jax.random.split(key, 7)

    # Small image input, NCHW like PyTorch.
    B, C, H, W = 2, 3, 16, 16
    x = jax.random.normal(k_x, (B, C, H, W), dtype=jnp.float32)

    # Deterministic synthetic parameters (shapes dictated by EmbNet.__init__).
    w_bb = jax.random.normal(k_bb, (C * H * W, FEAT), dtype=jnp.float32) * 0.05
    bn_gamma = 1.0 + 0.1 * jax.random.normal(k_g, (FEAT,), dtype=jnp.float32)
    bn_beta = 0.1 * jax.random.normal(k_b, (FEAT,), dtype=jnp.float32)
    bn_mean = 0.1 * jax.random.normal(k_m, (FEAT,), dtype=jnp.float32)
    bn_var = jnp.abs(jax.random.normal(k_v, (FEAT,), dtype=jnp.float32)) + 0.5
    # PyTorch fc.weight is (dim, 2048); stored pre-transposed as (2048, dim).
    fc_w = jax.random.normal(k_w, (FEAT, EMB_DIM), dtype=jnp.float32) * 0.02

    feat = standin_backbone(x, w_bb)                              # (B, 2048)
    emb = embnet_head(feat, bn_gamma, bn_beta, bn_mean, bn_var, fc_w)
    emb = jax.block_until_ready(emb)

    assert emb.shape == (B, EMB_DIM)

    # Tight check against a reference that matches the kernel arithmetic
    # (bf16 weights, f32 accumulation).
    ref_bf16 = head_ref_bf16(feat, bn_gamma, bn_beta, bn_mean, bn_var, fc_w)
    assert jnp.allclose(emb, ref_bf16, atol=1e-4, rtol=1e-4)

    # Looser check against the full-f32 EmbNet math (bf16 weight rounding).
    ref_f32 = head_ref_f32(feat, bn_gamma, bn_beta, bn_mean, bn_var, fc_w)
    assert jnp.allclose(emb, ref_f32, atol=1e-2, rtol=1e-2)

    # Embeddings are unit-norm along dim=1.
    assert jnp.allclose(jnp.linalg.norm(emb, axis=1), 1.0, atol=1e-5)

    print("KERNEL_OK")
</pallas_src>

<mosaic_0001>
module attributes {stable_mosaic.version = 11 : i64} {
  func.func @embnet_head_kernel(%arg0: i32, %arg1: memref<8x2048xf32, #tpu.memory_space<vmem>>, %arg2: memref<2048x512xbf16, #tpu.memory_space<vmem>>, %arg3: memref<1x512xf32, #tpu.memory_space<vmem>>, %arg4: memref<8x512xf32, #tpu.memory_space<vmem>>) attributes {dimension_semantics = [#tpu.dimension_semantics<parallel>], iteration_bounds = array<i64: 1>, scalar_prefetch = 0 : i64, scratch_operands = 0 : i64, tpu.core_type = #tpu.core_type<tc>, window_params = [{transform_indices = @transform_0, window_bounds = array<i64: 8, 2048>}, {pipeline_mode = #tpu.pipeline_mode<synchronous>, transform_indices = @transform_1, window_bounds = array<i64: 2048, 512>}, {pipeline_mode = #tpu.pipeline_mode<synchronous>, transform_indices = @transform_2, window_bounds = array<i64: 1, 512>}, {transform_indices = @transform_3, window_bounds = array<i64: 8, 512>}]} {
    %c0 = arith.constant 0 : index
    %c0_0 = arith.constant 0 : index
    %0 = vector.load %arg1[%c0, %c0_0] : memref<8x2048xf32, #tpu.memory_space<vmem>>, vector<8x2048xf32>
    %1 = arith.truncf %0 : vector<8x2048xf32> to vector<8x2048xbf16>
    %c0_1 = arith.constant 0 : index
    %c0_2 = arith.constant 0 : index
    %2 = vector.load %arg2[%c0_1, %c0_2] : memref<2048x512xbf16, #tpu.memory_space<vmem>>, vector<2048x512xbf16>
    %cst = arith.constant dense<0.000000e+00> : vector<8x512xf32>
    %3 = tpu.matmul %1, %2, %cst {dimension_numbers = #tpu.dot_dimension_numbers<[1], [0], [0], [1], [0, 0, 1, 1], [], []>} : vector<8x2048xbf16>, vector<2048x512xbf16>, vector<8x512xf32> -> vector<8x512xf32>
    %c0_3 = arith.constant 0 : index
    %c0_4 = arith.constant 0 : index
    %4 = vector.load %arg3[%c0_3, %c0_4] : memref<1x512xf32, #tpu.memory_space<vmem>>, vector<1x512xf32>
    %5 = vector.broadcast %4 : vector<1x512xf32> to vector<8x512xf32>
    %6 = arith.addf %3, %5 : vector<8x512xf32>
    %7 = arith.mulf %6, %6 : vector<8x512xf32>
    %cst_5 = arith.constant dense<0.000000e+00> : vector<8xf32>
    %8 = vector.multi_reduction <add>, %7, %cst_5 [1] : vector<8x512xf32> to vector<8xf32>
    %9 = vector.shape_cast %8 : vector<8xf32> to vector<8x1xf32>
    %10 = math.sqrt %9 : vector<8x1xf32>
    %cst_6 = arith.constant 9.99999996E-13 : f32
    %11 = vector.broadcast %cst_6 : f32 to vector<8x1xf32>
    %12 = arith.maximumf %10, %11 : vector<8x1xf32>
    %13 = vector.broadcast %12 : vector<8x1xf32> to vector<8x512xf32>
    %14 = arith.divf %6, %13 : vector<8x512xf32>
    %c0_7 = arith.constant 0 : index
    %c0_8 = arith.constant 0 : index
    %15 = vector.load %arg4[%c0_7, %c0_8] : memref<8x512xf32, #tpu.memory_space<vmem>>, vector<8x512xf32>
    tpu.vector_store %arg4[%c0_7, %c0_8], %14 {strides = array<i32>} : memref<8x512xf32, #tpu.memory_space<vmem>>, vector<8x512xf32>,
    return
  }
  func.func @transform_0(%arg0: i32) -> (i32, i32) {
    %c0_i32 = arith.constant 0 : i32
    %c0_i32_0 = arith.constant 0 : i32
    return %arg0, %c0_i32 : i32, i32
  }
  func.func @transform_1(%arg0: i32) -> (i32, i32) {
    %c0_i32 = arith.constant 0 : i32
    %c0_i32_0 = arith.constant 0 : i32
    %c0_i32_1 = arith.constant 0 : i32
    return %c0_i32, %c0_i32_0 : i32, i32
  }
  func.func @transform_2(%arg0: i32) -> (i32, i32) {
    %c0_i32 = arith.constant 0 : i32
    %c0_i32_0 = arith.constant 0 : i32
    %c0_i32_1 = arith.constant 0 : i32
    return %c0_i32, %c0_i32_0 : i32, i32
  }
  func.func @transform_3(%arg0: i32) -> (i32, i32) {
    %c0_i32 = arith.constant 0 : i32
    %c0_i32_0 = arith.constant 0 : i32
    return %arg0, %c0_i32 : i32, i32
  }
}

</mosaic_0001>

<llo_original>
// kernel: tpu_custom_call.1
$region0: #{tpu_custom_call.1}
  #allocation0 [shape = 'u32[]', space=smem, size = 0x4, offset = 0x4, fixed_abs, tag = 'smem constant byte address 0x4 - core index']
  #allocation1 [shape = 'u32[144,128]{1,0:T(1,128)}', space=vmem, size = 0x12000, scoped, tag = 'internal scratch']
  %s0 = inlined_call_operand.hbm [shape: f32[8,2048], index: 0, kind: input, shape index: {}]
  %s1 = inlined_call_operand.hbm [shape: bf16[2048,512], index: 1, kind: input, shape index: {}]
  %s2 = inlined_call_operand.hbm [shape: f32[1,512], index: 2, kind: input, shape index: {}]
  %s3 = inlined_call_operand.hbm [shape: f32[8,512], index: 3, kind: output, shape index: {}]
  %s4 = sld [smem:[#allocation0]]
  $region34: #{tpu_custom_call.1} parent=0
    _
  %s6 = ssub.s32 1, %s4
  %s7 = scalar_select 0, %s6, %s4
  $region1: #{tpu_custom_call.1} parent=0
    #allocation2 [shape = 'u8[65536]{0}', space=vmem, size = 0x10000, scoped, tag = 'input window, operand 0, single buffered']
    #allocation3 [shape = 's32[1]{0}', space=sflag, size = 0x4, scoped, tag = 'scoped memory for tpu_custom_call.1']
    #allocation4 [shape = 's32[1]{0}', space=sflag, size = 0x4, scoped, tag = 'scoped memory for tpu_custom_call.1']
    #allocation5 [shape = 'u8[2097152]{0}', space=vmem, size = 0x200000, scoped, tag = 'input window, operand 1, single buffered']
    #allocation6 [shape = 's32[1]{0}', space=sflag, size = 0x4, scoped, tag = 'scoped memory for tpu_custom_call.1']
    #allocation7 [shape = 'u8[2048]{0}', space=vmem, size = 0x800, scoped, tag = 'input window, operand 2, single buffered']
    #allocation8 [shape = 'u8[16384]{0}', space=vmem, size = 0x4000, scoped, tag = 'output window, operand 0, single buffered']
    %8 = vsyncpa [#allocation3], 0
    %9 = vsyncpa [#allocation6], 0
    %10 = vsyncpa [#allocation4], 0
    // Predicated region
    $region2: #{tpu_custom_call.1} parent=1 // pred_check
      _
    $region3: #{tpu_custom_call.1} parent=1 // pred_check_branch
      %12 = sbr.rel (0) target = $region5
    $region4: #{tpu_custom_call.1} parent=1 // pred_region
      %s14 = ssub.s32 2048, 2048
      %15 = vsyncadd [#allocation3], %s14
      %s17 = sshll.u32 [#allocation2], 4
      %s18 = int_to_ptr.vmem [resolvable:$true] %s17
      %20 = dma.hbm_to_vmem [thread:$0]  %s0, 2048, %s18, [#allocation3]
    $region5: #{tpu_custom_call.1} parent=1 // pred_fallthru
      _
    // Predicated region
    $region6: #{tpu_custom_call.1} parent=1 // pred_check
      _
    $region7: #{tpu_custom_call.1} parent=1 // pred_check_branch
      %22 = sbr.rel (0) target = $region9
    $region8: #{tpu_custom_call.1} parent=1 // pred_region
      %s24 = ssub.s32 65536, 65536
      %25 = vsyncadd [#allocation6], %s24
      %s26 = sshll.u32 [#allocation5], 4
      %s27 = int_to_ptr.vmem [resolvable:$true] %s26
      %32 = dma.hbm_to_vmem [thread:$0]  %s1, 65536, %s27, [#allocation6], 256, 256, 16
    $region9: #{tpu_custom_call.1} parent=1 // pred_fallthru
      _
    // Predicated region
    $region10: #{tpu_custom_call.1} parent=1 // pred_check
      _
    $region11: #{tpu_custom_call.1} parent=1 // pred_check_branch
      %34 = sbr.rel (0) target = $region13
    $region12: #{tpu_custom_call.1} parent=1 // pred_region
      %s36 = ssub.s32 64, 64
      %37 = vsyncadd [#allocation6], %s36
      %s39 = sshll.u32 [#allocation7], 4
      %s40 = int_to_ptr.vmem [resolvable:$true] %s39
      %42 = dma.hbm_to_vmem [thread:$0]  %s2, 64, %s40, [#allocation6]
    $region13: #{tpu_custom_call.1} parent=1 // pred_fallthru
      _
    // Predicated region
    $region14: #{tpu_custom_call.1} parent=1 // pred_check
      _
    $region15: #{tpu_custom_call.1} parent=1 // pred_check_branch
      %44 = sbr.rel (0) target = $region17
    $region16: #{tpu_custom_call.1} parent=1 // pred_region
      %45 = dma.done [#allocation3], 2048
    $region17: #{tpu_custom_call.1} parent=1 // pred_fallthru
      _
    // Predicated region
    $region18: #{tpu_custom_call.1} parent=1 // pred_check
      _
    $region19: #{tpu_custom_call.1} parent=1 // pred_check_branch
      %47 = sbr.rel (0) target = $region21
    $region20: #{tpu_custom_call.1} parent=1 // pred_region
      %48 = dma.done [#allocation6], 65536
    $region21: #{tpu_custom_call.1} parent=1 // pred_fallthru
      _
    // Predicated region
    $region22: #{tpu_custom_call.1} parent=1 // pred_check
      _
    $region23: #{tpu_custom_call.1} parent=1 // pred_check_branch
      %50 = sbr.rel (0) target = $region25
    $region24: #{tpu_custom_call.1} parent=1 // pred_region
      %51 = dma.done [#allocation6], 64
    $region25: #{tpu_custom_call.1} parent=1 // pred_fallthru
      _
    %v52 = vld [vmem:[#allocation2] sm:$0xff]
    %v53 = vld [vmem:[#allocation2 + $0x8] sm:$0xff]
    %v54 = vld [vmem:[#allocation2 + $0x10] sm:$0xff]
    %v55 = vld [vmem:[#allocation2 + $0x18] sm:$0xff]
    %v56 = vld [vmem:[#allocation2 + $0x20] sm:$0xff]
    %v57 = vld [vmem:[#allocation2 + $0x28] sm:$0xff]
    %v58 = vld [vmem:[#allocation2 + $0x30] sm:$0xff]
    %v59 = vld [vmem:[#allocation2 + $0x38] sm:$0xff]
    %v60 = vld [vmem:[#allocation2 + $0x40] sm:$0xff]
    %v61 = vld [vmem:[#allocation2 + $0x48] sm:$0xff]
    %v62 = vld [vmem:[#allocation2 + $0x50] sm:$0xff]
    %v63 = vld [vmem:[#allocation2 + $0x58] sm:$0xff]
    %v64 = vld [vmem:[#allocation2 + $0x60] sm:$0xff]
    %v65 = vld [vmem:[#allocation2 + $0x68] sm:$0xff]
    %v66 = vld [vmem:[#allocation2 + $0x70] sm:$0xff]
    %v67 = vld [vmem:[#allocation2 + $0x78] sm:$0xff]
    %v68 = vpack.c.bf16 %v52, %v52
    %v69 = vpack.c.bf16 %v53, %v53
    %v70 = vpack.c.bf16 %v54, %v54
    %v71 = vpack.c.bf16 %v55, %v55
    %v72 = vpack.c.bf16 %v56, %v56
    %v73 = vpack.c.bf16 %v57, %v57
    %v74 = vpack.c.bf16 %v58, %v58
    %v75 = vpack.c.bf16 %v59, %v59
    %v76 = vpack.c.bf16 %v60, %v60
    %v77 = vpack.c.bf16 %v61, %v61
    %v78 = vpack.c.bf16 %v62, %v62
    %v79 = vpack.c.bf16 %v63, %v63
    %v80 = vpack.c.bf16 %v64, %v64
    %v81 = vpack.c.bf16 %v65, %v65
    %v82 = vpack.c.bf16 %v66, %v66
    %v83 = vpack.c.bf16 %v67, %v67
    %v84 = vld [vmem:[#allocation5] sm:$0xff]
    %v85 = vld [vmem:[#allocation5 + $0x8] sm:$0xff]
    %v86 = vld [vmem:[#allocation5 + $0x10] sm:$0xff]
    %v87 = vld [vmem:[#allocation5 + $0x18] sm:$0xff]
    %v88 = vld [vmem:[#allocation5 + $0x20] sm:$0xff]
    %v89 = vld [vmem:[#allocation5 + $0x28] sm:$0xff]
    %v90 = vld [vmem:[#allocation5 + $0x30] sm:$0xff]
    %v91 = vld [vmem:[#allocation5 + $0x38] sm:$0xff]
    %v92 = vld [vmem:[#allocation5 + $0x40] sm:$0xff]
    %v93 = vld [vmem:[#allocation5 + $0x48] sm:$0xff]
    %v94 = vld [vmem:[#allocation5 + $0x50] sm:$0xff]
    %v95 = vld [vmem:[#allocation5 + $0x58] sm:$0xff]
    %v96 = vld [vmem:[#allocation5 + $0x60] sm:$0xff]
    %v97 = vld [vmem:[#allocation5 + $0x68] sm:$0xff]
    %v98 = vld [vmem:[#allocation5 + $0x70] sm:$0xff]
    %v99 = vld [vmem:[#allocation5 + $0x78] sm:$0xff]
    %v100 = vld [vmem:[#allocation5 + $0x80] sm:$0xff]
    %v101 = vld [vmem:[#allocation5 + $0x88] sm:$0xff]
    %v102 = vld [vmem:[#allocation5 + $0x90] sm:$0xff]
    %v103 = vld [vmem:[#allocation5 + $0x98] sm:$0xff]
    %v104 = vld [vmem:[#allocation5 + $0xa0] sm:$0xff]
    %v105 = vld [vmem:[#allocation5 + $0xa8] sm:$0xff]
    %v106 = vld [vmem:[#allocation5 + $0xb0] sm:$0xff]
    %v107 = vld [vmem:[#allocation5 + $0xb8] sm:$0xff]
    %v108 = vld [vmem:[#allocation5 + $0xc0] sm:$0xff]
    %v109 = vld [vmem:[#allocation5 + $0xc8] sm:$0xff]
    %v110 = vld [vmem:[#allocation5 + $0xd0] sm:$0xff]
    %v111 = vld [vmem:[#allocation5 + $0xd8] sm:$0xff]
    %v112 = vld [vmem:[#allocation5 + $0xe0] sm:$0xff]
    %v113 = vld [vmem:[#allocation5 + $0xe8] sm:$0xff]
    %v114 = vld [vmem:[#allocation5 + $0xf0] sm:$0xff]
    %v115 = vld [vmem:[#allocation5 + $0xf8] sm:$0xff]
    %v116 = vld [vmem:[#allocation5 + $0x100] sm:$0xff]
    %v117 = vld [vmem:[#allocation5 + $0x108] sm:$0xff]
    %v118 = vld [vmem:[#allocation5 + $0x110] sm:$0xff]
    %v119 = vld [vmem:[#allocation5 + $0x118] sm:$0xff]
    %v120 = vld [vmem:[#allocation5 + $0x120] sm:$0xff]
    %v121 = vld [vmem:[#allocation5 + $0x128] sm:$0xff]
    %v122 = vld [vmem:[#allocation5 + $0x130] sm:$0xff]
    %v123 = vld [vmem:[#allocation5 + $0x138] sm:$0xff]
    %v124 = vld [vmem:[#allocation5 + $0x140] sm:$0xff]
    %v125 = vld [vmem:[#allocation5 + $0x148] sm:$0xff]
    %v126 = vld [vmem:[#allocation5 + $0x150] sm:$0xff]
    %v127 = vld [vmem:[#allocation5 + $0x158] sm:$0xff]
    %v128 = vld [vmem:[#allocation5 + $0x160] sm:$0xff]
    %v129 = vld [vmem:[#allocation5 + $0x168] sm:$0xff]
    %v130 = vld [vmem:[#allocation5 + $0x170] sm:$0xff]
    %v131 = vld [vmem:[#allocation5 + $0x178] sm:$0xff]
    %v132 = vld [vmem:[#allocation5 + $0x180] sm:$0xff]
    %v133 = vld [vmem:[#allocation5 + $0x188] sm:$0xff]
    %v134 = vld [vmem:[#allocation5 + $0x190] sm:$0xff]
    %v135 = vld [vmem:[#allocation5 + $0x198] sm:$0xff]
    %v136 = vld [vmem:[#allocation5 + $0x1a0] sm:$0xff]
    %v137 = vld [vmem:[#allocation5 + $0x1a8] sm:$0xff]
    %v138 = vld [vmem:[#allocation5 + $0x1b0] sm:$0xff]
    %v139 = vld [vmem:[#allocation5 + $0x1b8] sm:$0xff]
    %v140 = vld [vmem:[#allocation5 + $0x1c0] sm:$0xff]
    %v141 = vld [vmem:[#allocation5 + $0x1c8] sm:$0xff]
    %v142 = vld [vmem:[#allocation5 + $0x1d0] sm:$0xff]
    %v143 = vld [vmem:[#allocation5 + $0x1d8] sm:$0xff]
    %v144 = vld [vmem:[#allocation5 + $0x1e0] sm:$0xff]
    %v145 = vld [vmem:[#allocation5 + $0x1e8] sm:$0xff]
    %v146 = vld [vmem:[#allocation5 + $0x1f0] sm:$0xff]
    %v147 = vld [vmem:[#allocation5 + $0x1f8] sm:$0xff]
    %v148 = vld [vmem:[#allocation5 + $0x200] sm:$0xff]
    %v149 = vld [vmem:[#allocation5 + $0x208] sm:$0xff]
    %v150 = vld [vmem:[#allocation5 + $0x210] sm:$0xff]
    %v151 = vld [vmem:[#allocation5 + $0x218] sm:$0xff]
    %v152 = vld [vmem:[#allocation5 + $0x220] sm:$0xff]
    %v153 = vld [vmem:[#allocation5 + $0x228] sm:$0xff]
    %v154 = vld [vmem:[#allocation5 + $0x230] sm:$0xff]
    %v155 = vld [vmem:[#allocation5 + $0x238] sm:$0xff]
    %v156 = vld [vmem:[#allocation5 + $0x240] sm:$0xff]
    %v157 = vld [vmem:[#allocation5 + $0x248] sm:$0xff]
    %v158 = vld [vmem:[#allocation5 + $0x250] sm:$0xff]
    %v159 = vld [vmem:[#allocation5 + $0x258] sm:$0xff]
    %v160 = vld [vmem:[#allocation5 + $0x260] sm:$0xff]
    %v161 = vld [vmem:[#allocation5 + $0x268] sm:$0xff]
    %v162 = vld [vmem:[#allocation5 + $0x270] sm:$0xff]
    %v163 = vld [vmem:[#allocation5 + $0x278] sm:$0xff]
    %v164 = vld [vmem:[#allocation5 + $0x280] sm:$0xff]
    %v165 = vld [vmem:[#allocation5 + $0x288] sm:$0xff]
    %v166 = vld [vmem:[#allocation5 + $0x290] sm:$0xff]
    %v167 = vld [vmem:[#allocation5 + $0x298] sm:$0xff]
    %v168 = vld [vmem:[#allocation5 + $0x2a0] sm:$0xff]
    %v169 = vld [vmem:[#allocation5 + $0x2a8] sm:$0xff]
    %v170 = vld [vmem:[#allocation5 + $0x2b0] sm:$0xff]
    %v171 = vld [vmem:[#allocation5 + $0x2b8] sm:$0xff]
    %v172 = vld [vmem:[#allocation5 + $0x2c0] sm:$0xff]
    %v173 = vld [vmem:[#allocation5 + $0x2c8] sm:$0xff]
    %v174 = vld [vmem:[#allocation5 + $0x2d0] sm:$0xff]
    %v175 = vld [vmem:[#allocation5 + $0x2d8] sm:$0xff]
    %v176 = vld [vmem:[#allocation5 + $0x2e0] sm:$0xff]
    %v177 = vld [vmem:[#allocation5 + $0x2e8] sm:$0xff]
    %v178 = vld [vmem:[#allocation5 + $0x2f0] sm:$0xff]
    %v179 = vld [vmem:[#allocation5 + $0x2f8] sm:$0xff]
    %v180 = vld [vmem:[#allocation5 + $0x300] sm:$0xff]
    %v181 = vld [vmem:[#allocation5 + $0x308] sm:$0xff]
    %v182 = vld [vmem:[#allocation5 + $0x310] sm:$0xff]
    %v183 = vld [vmem:[#allocation5 + $0x318] sm:$0xff]
    %v184 = vld [vmem:[#allocation5 + $0x320] sm:$0xff]
    %v185 = vld [vmem:[#allocation5 + $0x328] sm:$0xff]
    %v186 = vld [vmem:[#allocation5 + $0x330] sm:$0xff]
    %v187 = vld [vmem:[#allocation5 + $0x338] sm:$0xff]
    %v188 = vld [vmem:[#allocation5 + $0x340] sm:$0xff]
    %v189 = vld [vmem:[#allocation5 + $0x348] sm:$0xff]
    %v190 = vld [vmem:[#allocation5 + $0x350] sm:$0xff]
    %v191 = vld [vmem:[#allocation5 + $0x358] sm:$0xff]
    %v192 = vld [vmem:[#allocation5 + $0x360] sm:$0xff]
    %v193 = vld [vmem:[#allocation5 + $0x368] sm:$0xff]
    %v194 = vld [vmem:[#allocation5 + $0x370] sm:$0xff]
    %v195 = vld [vmem:[#allocation5 + $0x378] sm:$0xff]
    %v196 = vld [vmem:[#allocation5 + $0x380] sm:$0xff]
    %v197 = vld [vmem:[#allocation5 + $0x388] sm:$0xff]
    %v198 = vld [vmem:[#allocation5 + $0x390] sm:$0xff]
    %v199 = vld [vmem:[#allocation5 + $0x398] sm:$0xff]
    %v200 = vld [vmem:[#allocation5 + $0x3a0] sm:$0xff]
    %v201 = vld [vmem:[#allocation5 + $0x3a8] sm:$0xff]
    %v202 = vld [vmem:[#allocation5 + $0x3b0] sm:$0xff]
    %v203 = vld [vmem:[#allocation5 + $0x3b8] sm:$0xff]
    %v204 = vld [vmem:[#allocation5 + $0x3c0] sm:$0xff]
    %v205 = vld [vmem:[#allocation5 + $0x3c8] sm:$0xff]
    %v206 = vld [vmem:[#allocation5 + $0x3d0] sm:$0xff]
    %v207 = vld [vmem:[#allocation5 + $0x3d8] sm:$0xff]
    %v208 = vld [vmem:[#allocation5 + $0x3e0] sm:$0xff]
    %v209 = vld [vmem:[#allocation5 + $0x3e8] sm:$0xff]
    %v210 = vld [vmem:[#allocation5 + $0x3f0] sm:$0xff]
    %v211 = vld [vmem:[#allocation5 + $0x3f8] sm:$0xff]
    %v212 = vld [vmem:[#allocation5 + $0x400] sm:$0xff]
    %v213 = vld [vmem:[#allocation5 + $0x408] sm:$0xff]
    %v214 = vld [vmem:[#allocation5 + $0x410] sm:$0xff]
    %v215 = vld [vmem:[#allocation5 + $0x418] sm:$0xff]
    %v216 = vld [vmem:[#allocation5 + $0x420] sm:$0xff]
    %v217 = vld [vmem:[#allocation5 + $0x428] sm:$0xff]
    %v218 = vld [vmem:[#allocation5 + $0x430] sm:$0xff]
    %v219 = vld [vmem:[#allocation5 + $0x438] sm:$0xff]
    %v220 = vld [vmem:[#allocation5 + $0x440] sm:$0xff]
    %v221 = vld [vmem:[#allocation5 + $0x448] sm:$0xff]
    %v222 = vld [vmem:[#allocation5 + $0x450] sm:$0xff]
    %v223 = vld [vmem:[#allocation5 + $0x458] sm:$0xff]
    %v224 = vld [vmem:[#allocation5 + $0x460] sm:$0xff]
    %v225 = vld [vmem:[#allocation5 + $0x468] sm:$0xff]
    %v226 = vld [vmem:[#allocation5 + $0x470] sm:$0xff]
    %v227 = vld [vmem:[#allocation5 + $0x478] sm:$0xff]
    %v228 = vld [vmem:[#allocation5 + $0x480] sm:$0xff]
    %v229 = vld [vmem:[#allocation5 + $0x488] sm:$0xff]
    %v230 = vld [vmem:[#allocation5 + $0x490] sm:$0xff]
    %v231 = vld [vmem:[#allocation5 + $0x498] sm:$0xff]
    %v232 = vld [vmem:[#allocation5 + $0x4a0] sm:$0xff]
    %v233 = vld [vmem:[#allocation5 + $0x4a8] sm:$0xff]
    %v234 = vld [vmem:[#allocation5 + $0x4b0] sm:$0xff]
    %v235 = vld [vmem:[#allocation5 + $0x4b8] sm:$0xff]
    %v236 = vld [vmem:[#allocation5 + $0x4c0] sm:$0xff]
    %v237 = vld [vmem:[#allocation5 + $0x4c8] sm:$0xff]
    %v238 = vld [vmem:[#allocation5 + $0x4d0] sm:$0xff]
    %v239 = vld [vmem:[#allocation5 + $0x4d8] sm:$0xff]
    %v240 = vld [vmem:[#allocation5 + $0x4e0] sm:$0xff]
    %v241 = vld [vmem:[#allocation5 + $0x4e8] sm:$0xff]
    %v242 = vld [vmem:[#allocation5 + $0x4f0] sm:$0xff]
    %v243 = vld [vmem:[#allocation5 + $0x4f8] sm:$0xff]
    %v244 = vld [vmem:[#allocation5 + $0x500] sm:$0xff]
    %v245 = vld [vmem:[#allocation5 + $0x508] sm:$0xff]
    %v246 = vld [vmem:[#allocation5 + $0x510] sm:$0xff]
    %v247 = vld [vmem:[#allocation5 + $0x518] sm:$0xff]
    %v248 = vld [vmem:[#allocation5 + $0x520] sm:$0xff]
    %v249 = vld [vmem:[#allocation5 + $0x528] sm:$0xff]
    %v250 = vld [vmem:[#allocation5 + $0x530] sm:$0xff]
    %v251 = vld [vmem:[#allocation5 + $0x538] sm:$0xff]
    %v252 = vld [vmem:[#allocation5 + $0x540] sm:$0xff]
    %v253 = vld [vmem:[#allocation5 + $0x548] sm:$0xff]
    %v254 = vld [vmem:[#allocation5 + $0x550] sm:$0xff]
    %v255 = vld [vmem:[#allocation5 + $0x558] sm:$0xff]
    %v256 = vld [vmem:[#allocation5 + $0x560] sm:$0xff]
    %v257 = vld [vmem:[#allocation5 + $0x568] sm:$0xff]
    %v258 = vld [vmem:[#allocation5 + $0x570] sm:$0xff]
    %v259 = vld [vmem:[#allocation5 + $0x578] sm:$0xff]
    %v260 = vld [vmem:[#allocation5 + $0x580] sm:$0xff]
    %v261 = vld [vmem:[#allocation5 + $0x588] sm:$0xff]
    %v262 = vld [vmem:[#allocation5 + $0x590] sm:$0xff]
    %v263 = vld [vmem:[#allocation5 + $0x598] sm:$0xff]
    %v264 = vld [vmem:[#allocation5 + $0x5a0] sm:$0xff]
    %v265 = vld [vmem:[#allocation5 + $0x5a8] sm:$0xff]
    %v266 = vld [vmem:[#allocation5 + $0x5b0] sm:$0xff]
    %v267 = vld [vmem:[#allocation5 + $0x5b8] sm:$0xff]
    %v268 = vld [vmem:[#allocation5 + $0x5c0] sm:$0xff]
    %v269 = vld [vmem:[#allocation5 + $0x5c8] sm:$0xff]
    %v270 = vld [vmem:[#allocation5 + $0x5d0] sm:$0xff]
    %v271 = vld [vmem:[#allocation5 + $0x5d8] sm:$0xff]
    %v272 = vld [vmem:[#allocation5 + $0x5e0] sm:$0xff]
    %v273 = vld [vmem:[#allocation5 + $0x5e8] sm:$0xff]
    %v274 = vld [vmem:[#allocation5 + $0x5f0] sm:$0xff]
    %v275 = vld [vmem:[#allocation5 + $0x5f8] sm:$0xff]
    %v276 = vld [vmem:[#allocation5 + $0x600] sm:$0xff]
    %v277 = vld [vmem:[#allocation5 + $0x608] sm:$0xff]
    %v278 = vld [vmem:[#allocation5 + $0x610] sm:$0xff]
    %v279 = vld [vmem:[#allocation5 + $0x618] sm:$0xff]
    %v280 = vld [vmem:[#allocation5 + $0x620] sm:$0xff]
    %v281 = vld [vmem:[#allocation5 + $0x628] sm:$0xff]
    %v282 = vld [vmem:[#allocation5 + $0x630] sm:$0xff]
    %v283 = vld [vmem:[#allocation5 + $0x638] sm:$0xff]
    %v284 = vld [vmem:[#allocation5 + $0x640] sm:$0xff]
    %v285 = vld [vmem:[#allocation5 + $0x648] sm:$0xff]
    %v286 = vld [vmem:[#allocation5 + $0x650] sm:$0xff]
    %v287 = vld [vmem:[#allocation5 + $0x658] sm:$0xff]
    %v288 = vld [vmem:[#allocation5 + $0x660] sm:$0xff]
    %v289 = vld [vmem:[#allocation5 + $0x668] sm:$0xff]
    %v290 = vld [vmem:[#allocation5 + $0x670] sm:$0xff]
    %v291 = vld [vmem:[#allocation5 + $0x678] sm:$0xff]
    %v292 = vld [vmem:[#allocation5 + $0x680] sm:$0xff]
    %v293 = vld [vmem:[#allocation5 + $0x688] sm:$0xff]
    %v294 = vld [vmem:[#allocation5 + $0x690] sm:$0xff]
    %v295 = vld [vmem:[#allocation5 + $0x698] sm:$0xff]
    %v296 = vld [vmem:[#allocation5 + $0x6a0] sm:$0xff]
    %v297 = vld [vmem:[#allocation5 + $0x6a8] sm:$0xff]
    %v298 = vld [vmem:[#allocation5 + $0x6b0] sm:$0xff]
    %v299 = vld [vmem:[#allocation5 + $0x6b8] sm:$0xff]
    %v300 = vld [vmem:[#allocation5 + $0x6c0] sm:$0xff]
    %v301 = vld [vmem:[#allocation5 + $0x6c8] sm:$0xff]
    %v302 = vld [vmem:[#allocation5 + $0x6d0] sm:$0xff]
    %v303 = vld [vmem:[#allocation5 + $0x6d8] sm:$0xff]
    %v304 = vld [vmem:[#allocation5 + $0x6e0] sm:$0xff]
    %v305 = vld [vmem:[#allocation5 + $0x6e8] sm:$0xff]
    %v306 = vld [vmem:[#allocation5 + $0x6f0] sm:$0xff]
    %v307 = vld [vmem:[#allocation5 + $0x6f8] sm:$0xff]
    %v308 = vld [vmem:[#allocation5 + $0x700] sm:$0xff]
    %v309 = vld [vmem:[#allocation5 + $0x708] sm:$0xff]
    %v310 = vld [vmem:[#allocation5 + $0x710] sm:$0xff]
    %v311 = vld [vmem:[#allocation5 + $0x718] sm:$0xff]
    %v312 = vld [vmem:[#allocation5 + $0x720] sm:$0xff]
    %v313 = vld [vmem:[#allocation5 + $0x728] sm:$0xff]
    %v314 = vld [vmem:[#allocation5 + $0x730] sm:$0xff]
    %v315 = vld [vmem:[#allocation5 + $0x738] sm:$0xff]
    %v316 = vld [vmem:[#allocation5 + $0x740] sm:$0xff]
    %v317 = vld [vmem:[#allocation5 + $0x748] sm:$0xff]
    %v318 = vld [vmem:[#allocation5 + $0x750] sm:$0xff]
    %v319 = vld [vmem:[#allocation5 + $0x758] sm:$0xff]
    %v320 = vld [vmem:[#allocation5 + $0x760] sm:$0xff]
    %v321 = vld [vmem:[#allocation5 + $0x768] sm:$0xff]
    %v322 = vld [vmem:[#allocation5 + $0x770] sm:$0xff]
    %v323 = vld [vmem:[#allocation5 + $0x778] sm:$0xff]
    %v324 = vld [vmem:[#allocation5 + $0x780] sm:$0xff]
    %v325 = vld [vmem:[#allocation5 + $0x788] sm:$0xff]
    %v326 = vld [vmem:[#allocation5 + $0x790] sm:$0xff]
    %v327 = vld [vmem:[#allocation5 + $0x798] sm:$0xff]
    %v328 = vld [vmem:[#allocation5 + $0x7a0] sm:$0xff]
    %v329 = vld [vmem:[#allocation5 + $0x7a8] sm:$0xff]
    %v330 = vld [vmem:[#allocation5 + $0x7b0] sm:$0xff]
    %v331 = vld [vmem:[#allocation5 + $0x7b8] sm:$0xff]
    %v332 = vld [vmem:[#allocation5 + $0x7c0] sm:$0xff]
    %v333 = vld [vmem:[#allocation5 + $0x7c8] sm:$0xff]
    %v334 = vld [vmem:[#allocation5 + $0x7d0] sm:$0xff]
    %v335 = vld [vmem:[#allocation5 + $0x7d8] sm:$0xff]
    %v336 = vld [vmem:[#allocation5 + $0x7e0] sm:$0xff]
    %v337 = vld [vmem:[#allocation5 + $0x7e8] sm:$0xff]
    %v338 = vld [vmem:[#allocation5 + $0x7f0] sm:$0xff]
    %v339 = vld [vmem:[#allocation5 + $0x7f8] sm:$0xff]
    %v340 = vld [vmem:[#allocation5 + $0x800] sm:$0xff]
    %v341 = vld [vmem:[#allocation5 + $0x808] sm:$0xff]
    %v342 = vld [vmem:[#allocation5 + $0x810] sm:$0xff]
    %v343 = vld [vmem:[#allocation5 + $0x818] sm:$0xff]
    %v344 = vld [vmem:[#allocation5 + $0x820] sm:$0xff]
    %v345 = vld [vmem:[#allocation5 + $0x828] sm:$0xff]
    %v346 = vld [vmem:[#allocation5 + $0x830] sm:$0xff]
    %v347 = vld [vmem:[#allocation5 + $0x838] sm:$0xff]
    %v348 = vld [vmem:[#allocation5 + $0x840] sm:$0xff]
    %v349 = vld [vmem:[#allocation5 + $0x848] sm:$0xff]
    %v350 = vld [vmem:[#allocation5 + $0x850] sm:$0xff]
    %v351 = vld [vmem:[#allocation5 + $0x858] sm:$0xff]
    %v352 = vld [vmem:[#allocation5 + $0x860] sm:$0xff]
    %v353 = vld [vmem:[#allocation5 + $0x868] sm:$0xff]
    %v354 = vld [vmem:[#allocation5 + $0x870] sm:$0xff]
    %v355 = vld [vmem:[#allocation5 + $0x878] sm:$0xff]
    %v356 = vld [vmem:[#allocation5 + $0x880] sm:$0xff]
    %v357 = vld [vmem:[#allocation5 + $0x888] sm:$0xff]
    %v358 = vld [vmem:[#allocation5 + $0x890] sm:$0xff]
    %v359 = vld [vmem:[#allocation5 + $0x898] sm:$0xff]
    %v360 = vld [vmem:[#allocation5 + $0x8a0] sm:$0xff]
    %v361 = vld [vmem:[#allocation5 + $0x8a8] sm:$0xff]
    %v362 = vld [vmem:[#allocation5 + $0x8b0] sm:$0xff]
    %v363 = vld [vmem:[#allocation5 + $0x8b8] sm:$0xff]
    %v364 = vld [vmem:[#allocation5 + $0x8c0] sm:$0xff]
    %v365 = vld [vmem:[#allocation5 + $0x8c8] sm:$0xff]
    %v366 = vld [vmem:[#allocation5 + $0x8d0] sm:$0xff]
    %v367 = vld [vmem:[#allocation5 + $0x8d8] sm:$0xff]
    %v368 = vld [vmem:[#allocation5 + $0x8e0] sm:$0xff]
    %v369 = vld [vmem:[#allocation5 + $0x8e8] sm:$0xff]
    %v370 = vld [vmem:[#allocation5 + $0x8f0] sm:$0xff]
    %v371 = vld [vmem:[#allocation5 + $0x8f8] sm:$0xff]
    %v372 = vld [vmem:[#allocation5 + $0x900] sm:$0xff]
    %v373 = vld [vmem:[#allocation5 + $0x908] sm:$0xff]
    %v374 = vld [vmem:[#allocation5 + $0x910] sm:$0xff]
    %v375 = vld [vmem:[#allocation5 + $0x918] sm:$0xff]
    %v376 = vld [vmem:[#allocation5 + $0x920] sm:$0xff]
    %v377 = vld [vmem:[#allocation5 + $0x928] sm:$0xff]
    %v378 = vld [vmem:[#allocation5 + $0x930] sm:$0xff]
    %v379 = vld [vmem:[#allocation5 + $0x938] sm:$0xff]
    %v380 = vld [vmem:[#allocation5 + $0x940] sm:$0xff]
    %v381 = vld [vmem:[#allocation5 + $0x948] sm:$0xff]
    %v382 = vld [vmem:[#allocation5 + $0x950] sm:$0xff]
    %v383 = vld [vmem:[#allocation5 + $0x958] sm:$0xff]
    %v384 = vld [vmem:[#allocation5 + $0x960] sm:$0xff]
    %v385 = vld [vmem:[#allocation5 + $0x968] sm:$0xff]
    %v386 = vld [vmem:[#allocation5 + $0x970] sm:$0xff]
    %v387 = vld [vmem:[#allocation5 + $0x978] sm:$0xff]
    %v388 = vld [vmem:[#allocation5 + $0x980] sm:$0xff]
    %v389 = vld [vmem:[#allocation5 + $0x988] sm:$0xff]
    %v390 = vld [vmem:[#allocation5 + $0x990] sm:$0xff]
    %v391 = vld [vmem:[#allocation5 + $0x998] sm:$0xff]
    %v392 = vld [vmem:[#allocation5 + $0x9a0] sm:$0xff]
    %v393 = vld [vmem:[#allocation5 + $0x9a8] sm:$0xff]
    %v394 = vld [vmem:[#allocation5 + $0x9b0] sm:$0xff]
    %v395 = vld [vmem:[#allocation5 + $0x9b8] sm:$0xff]
    %v396 = vld [vmem:[#allocation5 + $0x9c0] sm:$0xff]
    %v397 = vld [vmem:[#allocation5 + $0x9c8] sm:$0xff]
    %v398 = vld [vmem:[#allocation5 + $0x9d0] sm:$0xff]
    %v399 = vld [vmem:[#allocation5 + $0x9d8] sm:$0xff]
    %v400 = vld [vmem:[#allocation5 + $0x9e0] sm:$0xff]
    %v401 = vld [vmem:[#allocation5 + $0x9e8] sm:$0xff]
    %v402 = vld [vmem:[#allocation5 + $0x9f0] sm:$0xff]
    %v403 = vld [vmem:[#allocation5 + $0x9f8] sm:$0xff]
    %v404 = vld [vmem:[#allocation5 + $0xa00] sm:$0xff]
    %v405 = vld [vmem:[#allocation5 + $0xa08] sm:$0xff]
    %v406 = vld [vmem:[#allocation5 + $0xa10] sm:$0xff]
    %v407 = vld [vmem:[#allocation5 + $0xa18] sm:$0xff]
    %v408 = vld [vmem:[#allocation5 + $0xa20] sm:$0xff]
    %v409 = vld [vmem:[#allocation5 + $0xa28] sm:$0xff]
    %v410 = vld [vmem:[#allocation5 + $0xa30] sm:$0xff]
    %v411 = vld [vmem:[#allocation5 + $0xa38] sm:$0xff]
    %v412 = vld [vmem:[#allocation5 + $0xa40] sm:$0xff]
    %v413 = vld [vmem:[#allocation5 + $0xa48] sm:$0xff]
    %v414 = vld [vmem:[#allocation5 + $0xa50] sm:$0xff]
    %v415 = vld [vmem:[#allocation5 + $0xa58] sm:$0xff]
    %v416 = vld [vmem:[#allocation5 + $0xa60] sm:$0xff]
    %v417 = vld [vmem:[#allocation5 + $0xa68] sm:$0xff]
    %v418 = vld [vmem:[#allocation5 + $0xa70] sm:$0xff]
    %v419 = vld [vmem:[#allocation5 + $0xa78] sm:$0xff]
    %v420 = vld [vmem:[#allocation5 + $0xa80] sm:$0xff]
    %v421 = vld [vmem:[#allocation5 + $0xa88] sm:$0xff]
    %v422 = vld [vmem:[#allocation5 + $0xa90] sm:$0xff]
    %v423 = vld [vmem:[#allocation5 + $0xa98] sm:$0xff]
    %v424 = vld [vmem:[#allocation5 + $0xaa0] sm:$0xff]
    %v425 = vld [vmem:[#allocation5 + $0xaa8] sm:$0xff]
    %v426 = vld [vmem:[#allocation5 + $0xab0] sm:$0xff]
    %v427 = vld [vmem:[#allocation5 + $0xab8] sm:$0xff]
    %v428 = vld [vmem:[#allocation5 + $0xac0] sm:$0xff]
    %v429 = vld [vmem:[#allocation5 + $0xac8] sm:$0xff]
    %v430 = vld [vmem:[#allocation5 + $0xad0] sm:$0xff]
    %v431 = vld [vmem:[#allocation5 + $0xad8] sm:$0xff]
    %v432 = vld [vmem:[#allocation5 + $0xae0] sm:$0xff]
    %v433 = vld [vmem:[#allocation5 + $0xae8] sm:$0xff]
    %v434 = vld [vmem:[#allocation5 + $0xaf0] sm:$0xff]
    %v435 = vld [vmem:[#allocation5 + $0xaf8] sm:$0xff]
    %v436 = vld [vmem:[#allocation5 + $0xb00] sm:$0xff]
    %v437 = vld [vmem:[#allocation5 + $0xb08] sm:$0xff]
    %v438 = vld [vmem:[#allocation5 + $0xb10] sm:$0xff]
    %v439 = vld [vmem:[#allocation5 + $0xb18] sm:$0xff]
    %v440 = vld [vmem:[#allocation5 + $0xb20] sm:$0xff]
    %v441 = vld [vmem:[#allocation5 + $0xb28] sm:$0xff]
    %v442 = vld [vmem:[#allocation5 + $0xb30] sm:$0xff]
    %v443 = vld [vmem:[#allocation5 + $0xb38] sm:$0xff]
    %v444 = vld [vmem:[#allocation5 + $0xb40] sm:$0xff]
    %v445 = vld [vmem:[#allocation5 + $0xb48] sm:$0xff]
    %v446 = vld [vmem:[#allocation5 + $0xb50] sm:$0xff]
    %v447 = vld [vmem:[#allocation5 + $0xb58] sm:$0xff]
    %v448 = vld [vmem:[#allocation5 + $0xb60] sm:$0xff]
    %v449 = vld [vmem:[#allocation5 + $0xb68] sm:$0xff]
    %v450 = vld [vmem:[#allocation5 + $0xb70] sm:$0xff]
    %v451 = vld [vmem:[#allocation5 + $0xb78] sm:$0xff]
    %v452 = vld [vmem:[#allocation5 + $0xb80] sm:$0xff]
    %v453 = vld [vmem:[#allocation5 + $0xb88] sm:$0xff]
    %v454 = vld [vmem:[#allocation5 + $0xb90] sm:$0xff]
    %v455 = vld [vmem:[#allocation5 + $0xb98] sm:$0xff]
    %v456 = vld [vmem:[#allocation5 + $0xba0] sm:$0xff]
    %v457 = vld [vmem:[#allocation5 + $0xba8] sm:$0xff]
    %v458 = vld [vmem:[#allocation5 + $0xbb0] sm:$0xff]
    %v459 = vld [vmem:[#allocation5 + $0xbb8] sm:$0xff]
    %v460 = vld [vmem:[#allocation5 + $0xbc0] sm:$0xff]
    %v461 = vld [vmem:[#allocation5 + $0xbc8] sm:$0xff]
    %v462 = vld [vmem:[#allocation5 + $0xbd0] sm:$0xff]
    %v463 = vld [vmem:[#allocation5 + $0xbd8] sm:$0xff]
    %v464 = vld [vmem:[#allocation5 + $0xbe0] sm:$0xff]
    %v465 = vld [vmem:[#allocation5 + $0xbe8] sm:$0xff]
    %v466 = vld [vmem:[#allocation5 + $0xbf0] sm:$0xff]
    %v467 = vld [vmem:[#allocation5 + $0xbf8] sm:$0xff]
    %v468 = vld [vmem:[#allocation5 + $0xc00] sm:$0xff]
    %v469 = vld [vmem:[#allocation5 + $0xc08] sm:$0xff]
    %v470 = vld [vmem:[#allocation5 + $0xc10] sm:$0xff]
    %v471 = vld [vmem:[#allocation5 + $0xc18] sm:$0xff]
    %v472 = vld [vmem:[#allocation5 + $0xc20] sm:$0xff]
    %v473 = vld [vmem:[#allocation5 + $0xc28] sm:$0xff]
    %v474 = vld [vmem:[#allocation5 + $0xc30] sm:$0xff]
    %v475 = vld [vmem:[#allocation5 + $0xc38] sm:$0xff]
    %v476 = vld [vmem:[#allocation5 + $0xc40] sm:$0xff]
    %v477 = vld [vmem:[#allocation5 + $0xc48] sm:$0xff]
    %v478 = vld [vmem:[#allocation5 + $0xc50] sm:$0xff]
    %v479 = vld [vmem:[#allocation5 + $0xc58] sm:$0xff]
    %v480 = vld [vmem:[#allocation5 + $0xc60] sm:$0xff]
    %v481 = vld [vmem:[#allocation5 + $0xc68] sm:$0xff]
    %v482 = vld [vmem:[#allocation5 + $0xc70] sm:$0xff]
    %v483 = vld [vmem:[#allocation5 + $0xc78] sm:$0xff]
    %v484 = vld [vmem:[#allocation5 + $0xc80] sm:$0xff]
    %v485 = vld [vmem:[#allocation5 + $0xc88] sm:$0xff]
    %v486 = vld [vmem:[#allocation5 + $0xc90] sm:$0xff]
    %v487 = vld [vmem:[#allocation5 + $0xc98] sm:$0xff]
    %v488 = vld [vmem:[#allocation5 + $0xca0] sm:$0xff]
    %v489 = vld [vmem:[#allocation5 + $0xca8] sm:$0xff]
    %v490 = vld [vmem:[#allocation5 + $0xcb0] sm:$0xff]
    %v491 = vld [vmem:[#allocation5 + $0xcb8] sm:$0xff]
    %v492 = vld [vmem:[#allocation5 + $0xcc0] sm:$0xff]
    %v493 = vld [vmem:[#allocation5 + $0xcc8] sm:$0xff]
    %v494 = vld [vmem:[#allocation5 + $0xcd0] sm:$0xff]
    %v495 = vld [vmem:[#allocation5 + $0xcd8] sm:$0xff]
    %v496 = vld [vmem:[#allocation5 + $0xce0] sm:$0xff]
    %v497 = vld [vmem:[#allocation5 + $0xce8] sm:$0xff]
    %v498 = vld [vmem:[#allocation5 + $0xcf0] sm:$0xff]
    %v499 = vld [vmem:[#allocation5 + $0xcf8] sm:$0xff]
    %v500 = vld [vmem:[#allocation5 + $0xd00] sm:$0xff]
    %v501 = vld [vmem:[#allocation5 + $0xd08] sm:$0xff]
    %v502 = vld [vmem:[#allocation5 + $0xd10] sm:$0xff]
    %v503 = vld [vmem:[#allocation5 + $0xd18] sm:$0xff]
    %v504 = vld [vmem:[#allocation5 + $0xd20] sm:$0xff]
    %v505 = vld [vmem:[#allocation5 + $0xd28] sm:$0xff]
    %v506 = vld [vmem:[#allocation5 + $0xd30] sm:$0xff]
    %v507 = vld [vmem:[#allocation5 + $0xd38] sm:$0xff]
    %v508 = vld [vmem:[#allocation5 + $0xd40] sm:$0xff]
    %v509 = vld [vmem:[#allocation5 + $0xd48] sm:$0xff]
    %v510 = vld [vmem:[#allocation5 + $0xd50] sm:$0xff]
    %v511 = vld [vmem:[#allocation5 + $0xd58] sm:$0xff]
    %v512 = vld [vmem:[#allocation5 + $0xd60] sm:$0xff]
    %v513 = vld [vmem:[#allocation5 + $0xd68] sm:$0xff]
    %v514 = vld [vmem:[#allocation5 + $0xd70] sm:$0xff]
    %v515 = vld [vmem:[#allocation5 + $0xd78] sm:$0xff]
    %v516 = vld [vmem:[#allocation5 + $0xd80] sm:$0xff]
    %v517 = vld [vmem:[#allocation5 + $0xd88] sm:$0xff]
    %v518 = vld [vmem:[#allocation5 + $0xd90] sm:$0xff]
    %v519 = vld [vmem:[#allocation5 + $0xd98] sm:$0xff]
    %v520 = vld [vmem:[#allocation5 + $0xda0] sm:$0xff]
    %v521 = vld [vmem:[#allocation5 + $0xda8] sm:$0xff]
    %v522 = vld [vmem:[#allocation5 + $0xdb0] sm:$0xff]
    %v523 = vld [vmem:[#allocation5 + $0xdb8] sm:$0xff]
    %v524 = vld [vmem:[#allocation5 + $0xdc0] sm:$0xff]
    %v525 = vld [vmem:[#allocation5 + $0xdc8] sm:$0xff]
    %v526 = vld [vmem:[#allocation5 + $0xdd0] sm:$0xff]
    %v527 = vld [vmem:[#allocation5 + $0xdd8] sm:$0xff]
    %v528 = vld [vmem:[#allocation5 + $0xde0] sm:$0xff]
    %v529 = vld [vmem:[#allocation5 + $0xde8] sm:$0xff]
    %v530 = vld [vmem:[#allocation5 + $0xdf0] sm:$0xff]
    %v531 = vld [vmem:[#allocation5 + $0xdf8] sm:$0xff]
    %v532 = vld [vmem:[#allocation5 + $0xe00] sm:$0xff]
    %v533 = vld [vmem:[#allocation5 + $0xe08] sm:$0xff]
    %v534 = vld [vmem:[#allocation5 + $0xe10] sm:$0xff]
    %v535 = vld [vmem:[#allocation5 + $0xe18] sm:$0xff]
    %v536 = vld [vmem:[#allocation5 + $0xe20] sm:$0xff]
    %v537 = vld [vmem:[#allocation5 + $0xe28] sm:$0xff]
    %v538 = vld [vmem:[#allocation5 + $0xe30] sm:$0xff]
    %v539 = vld [vmem:[#allocation5 + $0xe38] sm:$0xff]
    %v540 = vld [vmem:[#allocation5 + $0xe40] sm:$0xff]
    %v541 = vld [vmem:[#allocation5 + $0xe48] sm:$0xff]
    %v542 = vld [vmem:[#allocation5 + $0xe50] sm:$0xff]
    %v543 = vld [vmem:[#allocation5 + $0xe58] sm:$0xff]
    %v544 = vld [vmem:[#allocation5 + $0xe60] sm:$0xff]
    %v545 = vld [vmem:[#allocation5 + $0xe68] sm:$0xff]
    %v546 = vld [vmem:[#allocation5 + $0xe70] sm:$0xff]
    %v547 = vld [vmem:[#allocation5 + $0xe78] sm:$0xff]
    %v548 = vld [vmem:[#allocation5 + $0xe80] sm:$0xff]
    %v549 = vld [vmem:[#allocation5 + $0xe88] sm:$0xff]
    %v550 = vld [vmem:[#allocation5 + $0xe90] sm:$0xff]
    %v551 = vld [vmem:[#allocation5 + $0xe98] sm:$0xff]
    %v552 = vld [vmem:[#allocation5 + $0xea0] sm:$0xff]
    %v553 = vld [vmem:[#allocation5 + $0xea8] sm:$0xff]
    %v554 = vld [vmem:[#allocation5 + $0xeb0] sm:$0xff]
    %v555 = vld [vmem:[#allocation5 + $0xeb8] sm:$0xff]
    %v556 = vld [vmem:[#allocation5 + $0xec0] sm:$0xff]
    %v557 = vld [vmem:[#allocation5 + $0xec8] sm:$0xff]
    %v558 = vld [vmem:[#allocation5 + $0xed0] sm:$0xff]
    %v559 = vld [vmem:[#allocation5 + $0xed8] sm:$0xff]
    %v560 = vld [vmem:[#allocation5 + $0xee0] sm:$0xff]
    %v561 = vld [vmem:[#allocation5 + $0xee8] sm:$0xff]
    %v562 = vld [vmem:[#allocation5 + $0xef0] sm:$0xff]
    %v563 = vld [vmem:[#allocation5 + $0xef8] sm:$0xff]
    %v564 = vld [vmem:[#allocation5 + $0xf00] sm:$0xff]
    %v565 = vld [vmem:[#allocation5 + $0xf08] sm:$0xff]
    %v566 = vld [vmem:[#allocation5 + $0xf10] sm:$0xff]
    %v567 = vld [vmem:[#allocation5 + $0xf18] sm:$0xff]
    %v568 = vld [vmem:[#allocation5 + $0xf20] sm:$0xff]
    %v569 = vld [vmem:[#allocation5 + $0xf28] sm:$0xff]
    %v570 = vld [vmem:[#allocation5 + $0xf30] sm:$0xff]
    %v571 = vld [vmem:[#allocation5 + $0xf38] sm:$0xff]
    %v572 = vld [vmem:[#allocation5 + $0xf40] sm:$0xff]
    %v573 = vld [vmem:[#allocation5 + $0xf48] sm:$0xff]
    %v574 = vld [vmem:[#allocation5 + $0xf50] sm:$0xff]
    %v575 = vld [vmem:[#allocation5 + $0xf58] sm:$0xff]
    %v576 = vld [vmem:[#allocation5 + $0xf60] sm:$0xff]
    %v577 = vld [vmem:[#allocation5 + $0xf68] sm:$0xff]
    %v578 = vld [vmem:[#allocation5 + $0xf70] sm:$0xff]
    %v579 = vld [vmem:[#allocation5 + $0xf78] sm:$0xff]
    %v580 = vld [vmem:[#allocation5 + $0xf80] sm:$0xff]
    %v581 = vld [vmem:[#allocation5 + $0xf88] sm:$0xff]
    %v582 = vld [vmem:[#allocation5 + $0xf90] sm:$0xff]
    %v583 = vld [vmem:[#allocation5 + $0xf98] sm:$0xff]
    %v584 = vld [vmem:[#allocation5 + $0xfa0] sm:$0xff]
    %v585 = vld [vmem:[#allocation5 + $0xfa8] sm:$0xff]
    %v586 = vld [vmem:[#allocation5 + $0xfb0] sm:$0xff]
    %v587 = vld [vmem:[#allocation5 + $0xfb8] sm:$0xff]
    %v588 = vld [vmem:[#allocation5 + $0xfc0] sm:$0xff]
    %v589 = vld [vmem:[#allocation5 + $0xfc8] sm:$0xff]
    %v590 = vld [vmem:[#allocation5 + $0xfd0] sm:$0xff]
    %v591 = vld [vmem:[#allocation5 + $0xfd8] sm:$0xff]
    %v592 = vld [vmem:[#allocation5 + $0xfe0] sm:$0xff]
    %v593 = vld [vmem:[#allocation5 + $0xfe8] sm:$0xff]
    %v594 = vld [vmem:[#allocation5 + $0xff0] sm:$0xff]
    %v595 = vld [vmem:[#allocation5 + $0xff8] sm:$0xff]
    %v596 = vld [vmem:[#allocation7] sm:$0xf]
    %v598 = vlaneseq
    %v599 = vshrl.u32 %v598, 7
    %v600 = vsub.s32 0, %v599
    %v601 = vrot.slane %v596, %v600
    %v602 = vlaneseq
    %v603 = vshrl.u32 %v602, 7
    %v604 = vsub.s32 1, %v603
    %v605 = vrot.slane %v596, %v604
    %v606 = vlaneseq
    %v607 = vshrl.u32 %v606, 7
    %v608 = vsub.s32 2, %v607
    %v609 = vrot.slane %v596, %v608
    %v610 = vlaneseq
    %v611 = vshrl.u32 %v610, 7
    %v612 = vsub.s32 3, %v611
    %v613 = vrot.slane %v596, %v612
    %v1130 = vunpack.c.l.b16 %v84
    %v1131 = vunpack.c.h.b16 %v84
    %v1132 = vunpack.c.l.b16 %v85
    %v1133 = vunpack.c.h.b16 %v85
    %v1134 = vunpack.c.l.b16 %v86
    %v1135 = vunpack.c.h.b16 %v86
    %v1136 = vunpack.c.l.b16 %v87
    %v1137 = vunpack.c.h.b16 %v87
    %v1138 = vunpack.c.l.b16 %v88
    %v1139 = vunpack.c.h.b16 %v88
    %v1140 = vunpack.c.l.b16 %v89
    %v1141 = vunpack.c.h.b16 %v89
    %v1142 = vunpack.c.l.b16 %v90
    %v1143 = vunpack.c.h.b16 %v90
    %v1144 = vunpack.c.l.b16 %v91
    %v1145 = vunpack.c.h.b16 %v91
    %v1146 = vunpack.c.l.b16 %v92
    %v1147 = vunpack.c.h.b16 %v92
    %v1148 = vunpack.c.l.b16 %v93
    %v1149 = vunpack.c.h.b16 %v93
    %v1150 = vunpack.c.l.b16 %v94
    %v1151 = vunpack.c.h.b16 %v94
    %v1152 = vunpack.c.l.b16 %v95
    %v1153 = vunpack.c.h.b16 %v95
    %v1154 = vunpack.c.l.b16 %v96
    %v1155 = vunpack.c.h.b16 %v96
    %v1156 = vunpack.c.l.b16 %v97
    %v1157 = vunpack.c.h.b16 %v97
    %v1158 = vunpack.c.l.b16 %v98
    %v1159 = vunpack.c.h.b16 %v98
    %v1160 = vunpack.c.l.b16 %v99
    %v1161 = vunpack.c.h.b16 %v99
    %v1162 = vunpack.c.l.b16 %v100
    %v1163 = vunpack.c.h.b16 %v100
    %v1164 = vunpack.c.l.b16 %v101
    %v1165 = vunpack.c.h.b16 %v101
    %v1166 = vunpack.c.l.b16 %v102
    %v1167 = vunpack.c.h.b16 %v102
    %v1168 = vunpack.c.l.b16 %v103
    %v1169 = vunpack.c.h.b16 %v103
    %v1170 = vunpack.c.l.b16 %v104
    %v1171 = vunpack.c.h.b16 %v104
    %v1172 = vunpack.c.l.b16 %v105
    %v1173 = vunpack.c.h.b16 %v105
    %v1174 = vunpack.c.l.b16 %v106
    %v1175 = vunpack.c.h.b16 %v106
    %v1176 = vunpack.c.l.b16 %v107
    %v1177 = vunpack.c.h.b16 %v107
    %v1178 = vunpack.c.l.b16 %v108
    %v1179 = vunpack.c.h.b16 %v108
    %v1180 = vunpack.c.l.b16 %v109
    %v1181 = vunpack.c.h.b16 %v109
    %v1182 = vunpack.c.l.b16 %v110
    %v1183 = vunpack.c.h.b16 %v110
    %v1184 = vunpack.c.l.b16 %v111
    %v1185 = vunpack.c.h.b16 %v111
    %v1186 = vunpack.c.l.b16 %v112
    %v1187 = vunpack.c.h.b16 %v112
    %v1188 = vunpack.c.l.b16 %v113
    %v1189 = vunpack.c.h.b16 %v113
    %v1190 = vunpack.c.l.b16 %v114
    %v1191 = vunpack.c.h.b16 %v114
    %v1192 = vunpack.c.l.b16 %v115
    %v1193 = vunpack.c.h.b16 %v115
    %v1194 = vunpack.c.l.b16 %v116
    %v1195 = vunpack.c.h.b16 %v116
    %v1196 = vunpack.c.l.b16 %v117
    %v1197 = vunpack.c.h.b16 %v117
    %v1198 = vunpack.c.l.b16 %v118
    %v1199 = vunpack.c.h.b16 %v118
    %v1200 = vunpack.c.l.b16 %v119
    %v1201 = vunpack.c.h.b16 %v119
    %v1202 = vunpack.c.l.b16 %v120
    %v1203 = vunpack.c.h.b16 %v120
    %v1204 = vunpack.c.l.b16 %v121
    %v1205 = vunpack.c.h.b16 %v121
    %v1206 = vunpack.c.l.b16 %v122
    %v1207 = vunpack.c.h.b16 %v122
    %v1208 = vunpack.c.l.b16 %v123
    %v1209 = vunpack.c.h.b16 %v123
    %v1210 = vunpack.c.l.b16 %v124
    %v1211 = vunpack.c.h.b16 %v124
    %v1212 = vunpack.c.l.b16 %v125
    %v1213 = vunpack.c.h.b16 %v125
    %v1214 = vunpack.c.l.b16 %v126
    %v1215 = vunpack.c.h.b16 %v126
    %v1216 = vunpack.c.l.b16 %v127
    %v1217 = vunpack.c.h.b16 %v127
    %v1218 = vunpack.c.l.b16 %v128
    %v1219 = vunpack.c.h.b16 %v128
    %v1220 = vunpack.c.l.b16 %v129
    %v1221 = vunpack.c.h.b16 %v129
    %v1222 = vunpack.c.l.b16 %v130
    %v1223 = vunpack.c.h.b16 %v130
    %v1224 = vunpack.c.l.b16 %v131
    %v1225 = vunpack.c.h.b16 %v131
    %v1226 = vunpack.c.l.b16 %v132
    %v1227 = vunpack.c.h.b16 %v132
    %v1228 = vunpack.c.l.b16 %v133
    %v1229 = vunpack.c.h.b16 %v133
    %v1230 = vunpack.c.l.b16 %v134
    %v1231 = vunpack.c.h.b16 %v134
    %v1232 = vunpack.c.l.b16 %v135
    %v1233 = vunpack.c.h.b16 %v135
    %v1234 = vunpack.c.l.b16 %v136
    %v1235 = vunpack.c.h.b16 %v136
    %v1236 = vunpack.c.l.b16 %v137
    %v1237 = vunpack.c.h.b16 %v137
    %v1238 = vunpack.c.l.b16 %v138
    %v1239 = vunpack.c.h.b16 %v138
    %v1240 = vunpack.c.l.b16 %v139
    %v1241 = vunpack.c.h.b16 %v139
    %v1242 = vunpack.c.l.b16 %v140
    %v1243 = vunpack.c.h.b16 %v140
    %v1244 = vunpack.c.l.b16 %v141
    %v1245 = vunpack.c.h.b16 %v141
    %v1246 = vunpack.c.l.b16 %v142
    %v1247 = vunpack.c.h.b16 %v142
    %v1248 = vunpack.c.l.b16 %v143
    %v1249 = vunpack.c.h.b16 %v143
    %v1250 = vunpack.c.l.b16 %v144
    %v1251 = vunpack.c.h.b16 %v144
    %v1252 = vunpack.c.l.b16 %v145
    %v1253 = vunpack.c.h.b16 %v145
    %v1254 = vunpack.c.l.b16 %v146
    %v1255 = vunpack.c.h.b16 %v146
    %v1256 = vunpack.c.l.b16 %v147
    %v1257 = vunpack.c.h.b16 %v147
    %v1258 = vunpack.c.l.b16 %v148
    %v1259 = vunpack.c.h.b16 %v148
    %v1260 = vunpack.c.l.b16 %v149
    %v1261 = vunpack.c.h.b16 %v149
    %v1262 = vunpack.c.l.b16 %v150
    %v1263 = vunpack.c.h.b16 %v150
    %v1264 = vunpack.c.l.b16 %v151
    %v1265 = vunpack.c.h.b16 %v151
    %v1266 = vunpack.c.l.b16 %v152
    %v1267 = vunpack.c.h.b16 %v152
    %v1268 = vunpack.c.l.b16 %v153
    %v1269 = vunpack.c.h.b16 %v153
    %v1270 = vunpack.c.l.b16 %v154
    %v1271 = vunpack.c.h.b16 %v154
    %v1272 = vunpack.c.l.b16 %v155
    %v1273 = vunpack.c.h.b16 %v155
    %v1274 = vunpack.c.l.b16 %v156
    %v1275 = vunpack.c.h.b16 %v156
    %v1276 = vunpack.c.l.b16 %v157
    %v1277 = vunpack.c.h.b16 %v157
    %v1278 = vunpack.c.l.b16 %v158
    %v1279 = vunpack.c.h.b16 %v158
    %v1280 = vunpack.c.l.b16 %v159
    %v1281 = vunpack.c.h.b16 %v159
    %v1282 = vunpack.c.l.b16 %v160
    %v1283 = vunpack.c.h.b16 %v160
    %v1284 = vunpack.c.l.b16 %v161
    %v1285 = vunpack.c.h.b16 %v161
    %v1286 = vunpack.c.l.b16 %v162
    %v1287 = vunpack.c.h.b16 %v162
    %v1288 = vunpack.c.l.b16 %v163
    %v1289 = vunpack.c.h.b16 %v163
    %v1290 = vunpack.c.l.b16 %v164
    %v1291 = vunpack.c.h.b16 %v164
    %v1292 = vunpack.c.l.b16 %v165
    %v1293 = vunpack.c.h.b16 %v165
    %v1294 = vunpack.c.l.b16 %v166
    %v1295 = vunpack.c.h.b16 %v166
    %v1296 = vunpack.c.l.b16 %v167
    %v1297 = vunpack.c.h.b16 %v167
    %v1298 = vunpack.c.l.b16 %v168
    %v1299 = vunpack.c.h.b16 %v168
    %v1300 = vunpack.c.l.b16 %v169
    %v1301 = vunpack.c.h.b16 %v169
    %v1302 = vunpack.c.l.b16 %v170
    %v1303 = vunpack.c.h.b16 %v170
    %v1304 = vunpack.c.l.b16 %v171
    %v1305 = vunpack.c.h.b16 %v171
    %v1306 = vunpack.c.l.b16 %v172
    %v1307 = vunpack.c.h.b16 %v172
    %v1308 = vunpack.c.l.b16 %v173
    %v1309 = vunpack.c.h.b16 %v173
    %v1310 = vunpack.c.l.b16 %v174
    %v1311 = vunpack.c.h.b16 %v174
    %v1312 = vunpack.c.l.b16 %v175
    %v1313 = vunpack.c.h.b16 %v175
    %v1314 = vunpack.c.l.b16 %v176
    %v1315 = vunpack.c.h.b16 %v176
    %v1316 = vunpack.c.l.b16 %v177
    %v1317 = vunpack.c.h.b16 %v177
    %v1318 = vunpack.c.l.b16 %v178
    %v1319 = vunpack.c.h.b16 %v178
    %v1320 = vunpack.c.l.b16 %v179
    %v1321 = vunpack.c.h.b16 %v179
    %v1322 = vunpack.c.l.b16 %v180
    %v1323 = vunpack.c.h.b16 %v180
    %v1324 = vunpack.c.l.b16 %v181
    %v1325 = vunpack.c.h.b16 %v181
    %v1326 = vunpack.c.l.b16 %v182
    %v1327 = vunpack.c.h.b16 %v182
    %v1328 = vunpack.c.l.b16 %v183
    %v1329 = vunpack.c.h.b16 %v183
    %v1330 = vunpack.c.l.b16 %v184
    %v1331 = vunpack.c.h.b16 %v184
    %v1332 = vunpack.c.l.b16 %v185
    %v1333 = vunpack.c.h.b16 %v185
    %v1334 = vunpack.c.l.b16 %v186
    %v1335 = vunpack.c.h.b16 %v186
    %v1336 = vunpack.c.l.b16 %v187
    %v1337 = vunpack.c.h.b16 %v187
    %v1338 = vunpack.c.l.b16 %v188
    %v1339 = vunpack.c.h.b16 %v188
    %v1340 = vunpack.c.l.b16 %v189
    %v1341 = vunpack.c.h.b16 %v189
    %v1342 = vunpack.c.l.b16 %v190
    %v1343 = vunpack.c.h.b16 %v190
    %v1344 = vunpack.c.l.b16 %v191
    %v1345 = vunpack.c.h.b16 %v191
    %v1346 = vunpack.c.l.b16 %v192
    %v1347 = vunpack.c.h.b16 %v192
    %v1348 = vunpack.c.l.b16 %v193
    %v1349 = vunpack.c.h.b16 %v193
    %v1350 = vunpack.c.l.b16 %v194
    %v1351 = vunpack.c.h.b16 %v194
    %v1352 = vunpack.c.l.b16 %v195
    %v1353 = vunpack.c.h.b16 %v195
    %v1354 = vunpack.c.l.b16 %v196
    %v1355 = vunpack.c.h.b16 %v196
    %v1356 = vunpack.c.l.b16 %v197
    %v1357 = vunpack.c.h.b16 %v197
    %v1358 = vunpack.c.l.b16 %v198
    %v1359 = vunpack.c.h.b16 %v198
    %v1360 = vunpack.c.l.b16 %v199
    %v1361 = vunpack.c.h.b16 %v199
    %v1362 = vunpack.c.l.b16 %v200
    %v1363 = vunpack.c.h.b16 %v200
    %v1364 = vunpack.c.l.b16 %v201
    %v1365 = vunpack.c.h.b16 %v201
    %v1366 = vunpack.c.l.b16 %v202
    %v1367 = vunpack.c.h.b16 %v202
    %v1368 = vunpack.c.l.b16 %v203
    %v1369 = vunpack.c.h.b16 %v203
    %v1370 = vunpack.c.l.b16 %v204
    %v1371 = vunpack.c.h.b16 %v204
    %v1372 = vunpack.c.l.b16 %v205
    %v1373 = vunpack.c.h.b16 %v205
    %v1374 = vunpack.c.l.b16 %v206
    %v1375 = vunpack.c.h.b16 %v206
    %v1376 = vunpack.c.l.b16 %v207
    %v1377 = vunpack.c.h.b16 %v207
    %v1378 = vunpack.c.l.b16 %v208
    %v1379 = vunpack.c.h.b16 %v208
    %v1380 = vunpack.c.l.b16 %v209
    %v1381 = vunpack.c.h.b16 %v209
    %v1382 = vunpack.c.l.b16 %v210
    %v1383 = vunpack.c.h.b16 %v210
    %v1384 = vunpack.c.l.b16 %v211
    %v1385 = vunpack.c.h.b16 %v211
    %v1386 = vunpack.c.l.b16 %v212
    %v1387 = vunpack.c.h.b16 %v212
    %v1388 = vunpack.c.l.b16 %v213
    %v1389 = vunpack.c.h.b16 %v213
    %v1390 = vunpack.c.l.b16 %v214
    %v1391 = vunpack.c.h.b16 %v214
    %v1392 = vunpack.c.l.b16 %v215
    %v1393 = vunpack.c.h.b16 %v215
    %v1394 = vunpack.c.l.b16 %v216
    %v1395 = vunpack.c.h.b16 %v216
    %v1396 = vunpack.c.l.b16 %v217
    %v1397 = vunpack.c.h.b16 %v217
    %v1398 = vunpack.c.l.b16 %v218
    %v1399 = vunpack.c.h.b16 %v218
    %v1400 = vunpack.c.l.b16 %v219
    %v1401 = vunpack.c.h.b16 %v219
    %v1402 = vunpack.c.l.b16 %v220
    %v1403 = vunpack.c.h.b16 %v220
    %v1404 = vunpack.c.l.b16 %v221
    %v1405 = vunpack.c.h.b16 %v221
    %v1406 = vunpack.c.l.b16 %v222
    %v1407 = vunpack.c.h.b16 %v222
    %v1408 = vunpack.c.l.b16 %v223
    %v1409 = vunpack.c.h.b16 %v223
    %v1410 = vunpack.c.l.b16 %v224
    %v1411 = vunpack.c.h.b16 %v224
    %v1412 = vunpack.c.l.b16 %v225
    %v1413 = vunpack.c.h.b16 %v225
    %v1414 = vunpack.c.l.b16 %v226
    %v1415 = vunpack.c.h.b16 %v226
    %v1416 = vunpack.c.l.b16 %v227
    %v1417 = vunpack.c.h.b16 %v227
    %v1418 = vunpack.c.l.b16 %v228
    %v1419 = vunpack.c.h.b16 %v228
    %v1420 = vunpack.c.l.b16 %v229
    %v1421 = vunpack.c.h.b16 %v229
    %v1422 = vunpack.c.l.b16 %v230
    %v1423 = vunpack.c.h.b16 %v230
    %v1424 = vunpack.c.l.b16 %v231
    %v1425 = vunpack.c.h.b16 %v231
    %v1426 = vunpack.c.l.b16 %v232
    %v1427 = vunpack.c.h.b16 %v232
    %v1428 = vunpack.c.l.b16 %v233
    %v1429 = vunpack.c.h.b16 %v233
    %v1430 = vunpack.c.l.b16 %v234
    %v1431 = vunpack.c.h.b16 %v234
    %v1432 = vunpack.c.l.b16 %v235
    %v1433 = vunpack.c.h.b16 %v235
    %v1434 = vunpack.c.l.b16 %v236
    %v1435 = vunpack.c.h.b16 %v236
    %v1436 = vunpack.c.l.b16 %v237
    %v1437 = vunpack.c.h.b16 %v237
    %v1438 = vunpack.c.l.b16 %v238
    %v1439 = vunpack.c.h.b16 %v238
    %v1440 = vunpack.c.l.b16 %v239
    %v1441 = vunpack.c.h.b16 %v239
    %v1442 = vunpack.c.l.b16 %v240
    %v1443 = vunpack.c.h.b16 %v240
    %v1444 = vunpack.c.l.b16 %v241
    %v1445 = vunpack.c.h.b16 %v241
    %v1446 = vunpack.c.l.b16 %v242
    %v1447 = vunpack.c.h.b16 %v242
    %v1448 = vunpack.c.l.b16 %v243
    %v1449 = vunpack.c.h.b16 %v243
    %v1450 = vunpack.c.l.b16 %v244
    %v1451 = vunpack.c.h.b16 %v244
    %v1452 = vunpack.c.l.b16 %v245
    %v1453 = vunpack.c.h.b16 %v245
    %v1454 = vunpack.c.l.b16 %v246
    %v1455 = vunpack.c.h.b16 %v246
    %v1456 = vunpack.c.l.b16 %v247
    %v1457 = vunpack.c.h.b16 %v247
    %v1458 = vunpack.c.l.b16 %v248
    %v1459 = vunpack.c.h.b16 %v248
    %v1460 = vunpack.c.l.b16 %v249
    %v1461 = vunpack.c.h.b16 %v249
    %v1462 = vunpack.c.l.b16 %v250
    %v1463 = vunpack.c.h.b16 %v250
    %v1464 = vunpack.c.l.b16 %v251
    %v1465 = vunpack.c.h.b16 %v251
    %v1466 = vunpack.c.l.b16 %v252
    %v1467 = vunpack.c.h.b16 %v252
    %v1468 = vunpack.c.l.b16 %v253
    %v1469 = vunpack.c.h.b16 %v253
    %v1470 = vunpack.c.l.b16 %v254
    %v1471 = vunpack.c.h.b16 %v254
    %v1472 = vunpack.c.l.b16 %v255
    %v1473 = vunpack.c.h.b16 %v255
    %v1474 = vunpack.c.l.b16 %v256
    %v1475 = vunpack.c.h.b16 %v256
    %v1476 = vunpack.c.l.b16 %v257
    %v1477 = vunpack.c.h.b16 %v257
    %v1478 = vunpack.c.l.b16 %v258
    %v1479 = vunpack.c.h.b16 %v258
    %v1480 = vunpack.c.l.b16 %v259
    %v1481 = vunpack.c.h.b16 %v259
    %v1482 = vunpack.c.l.b16 %v260
    %v1483 = vunpack.c.h.b16 %v260
    %v1484 = vunpack.c.l.b16 %v261
    %v1485 = vunpack.c.h.b16 %v261
    %v1486 = vunpack.c.l.b16 %v262
    %v1487 = vunpack.c.h.b16 %v262
    %v1488 = vunpack.c.l.b16 %v263
    %v1489 = vunpack.c.h.b16 %v263
    %v1490 = vunpack.c.l.b16 %v264
    %v1491 = vunpack.c.h.b16 %v264
    %v1492 = vunpack.c.l.b16 %v265
    %v1493 = vunpack.c.h.b16 %v265
    %v1494 = vunpack.c.l.b16 %v266
    %v1495 = vunpack.c.h.b16 %v266
    %v1496 = vunpack.c.l.b16 %v267
    %v1497 = vunpack.c.h.b16 %v267
    %v1498 = vunpack.c.l.b16 %v268
    %v1499 = vunpack.c.h.b16 %v268
    %v1500 = vunpack.c.l.b16 %v269
    %v1501 = vunpack.c.h.b16 %v269
    %v1502 = vunpack.c.l.b16 %v270
    %v1503 = vunpack.c.h.b16 %v270
    %v1504 = vunpack.c.l.b16 %v271
    %v1505 = vunpack.c.h.b16 %v271
    %v1506 = vunpack.c.l.b16 %v272
    %v1507 = vunpack.c.h.b16 %v272
    %v1508 = vunpack.c.l.b16 %v273
    %v1509 = vunpack.c.h.b16 %v273
    %v1510 = vunpack.c.l.b16 %v274
    %v1511 = vunpack.c.h.b16 %v274
    %v1512 = vunpack.c.l.b16 %v275
    %v1513 = vunpack.c.h.b16 %v275
    %v1514 = vunpack.c.l.b16 %v276
    %v1515 = vunpack.c.h.b16 %v276
    %v1516 = vunpack.c.l.b16 %v277
    %v1517 = vunpack.c.h.b16 %v277
    %v1518 = vunpack.c.l.b16 %v278
    %v1519 = vunpack.c.h.b16 %v278
    %v1520 = vunpack.c.l.b16 %v279
    %v1521 = vunpack.c.h.b16 %v279
    %v1522 = vunpack.c.l.b16 %v280
    %v1523 = vunpack.c.h.b16 %v280
    %v1524 = vunpack.c.l.b16 %v281
    %v1525 = vunpack.c.h.b16 %v281
    %v1526 = vunpack.c.l.b16 %v282
    %v1527 = vunpack.c.h.b16 %v282
    %v1528 = vunpack.c.l.b16 %v283
    %v1529 = vunpack.c.h.b16 %v283
    %v1530 = vunpack.c.l.b16 %v284
    %v1531 = vunpack.c.h.b16 %v284
    %v1532 = vunpack.c.l.b16 %v285
    %v1533 = vunpack.c.h.b16 %v285
    %v1534 = vunpack.c.l.b16 %v286
    %v1535 = vunpack.c.h.b16 %v286
    %v1536 = vunpack.c.l.b16 %v287
    %v1537 = vunpack.c.h.b16 %v287
    %v1538 = vunpack.c.l.b16 %v288
    %v1539 = vunpack.c.h.b16 %v288
    %v1540 = vunpack.c.l.b16 %v289
    %v1541 = vunpack.c.h.b16 %v289
    %v1542 = vunpack.c.l.b16 %v290
    %v1543 = vunpack.c.h.b16 %v290
    %v1544 = vunpack.c.l.b16 %v291
    %v1545 = vunpack.c.h.b16 %v291
    %v1546 = vunpack.c.l.b16 %v292
    %v1547 = vunpack.c.h.b16 %v292
    %v1548 = vunpack.c.l.b16 %v293
    %v1549 = vunpack.c.h.b16 %v293
    %v1550 = vunpack.c.l.b16 %v294
    %v1551 = vunpack.c.h.b16 %v294
    %v1552 = vunpack.c.l.b16 %v295
    %v1553 = vunpack.c.h.b16 %v295
    %v1554 = vunpack.c.l.b16 %v296
    %v1555 = vunpack.c.h.b16 %v296
    %v1556 = vunpack.c.l.b16 %v297
    %v1557 = vunpack.c.h.b16 %v297
    %v1558 = vunpack.c.l.b16 %v298
    %v1559 = vunpack.c.h.b16 %v298
    %v1560 = vunpack.c.l.b16 %v299
    %v1561 = vunpack.c.h.b16 %v299
    %v1562 = vunpack.c.l.b16 %v300
    %v1563 = vunpack.c.h.b16 %v300
    %v1564 = vunpack.c.l.b16 %v301
    %v1565 = vunpack.c.h.b16 %v301
    %v1566 = vunpack.c.l.b16 %v302
    %v1567 = vunpack.c.h.b16 %v302
    %v1568 = vunpack.c.l.b16 %v303
    %v1569 = vunpack.c.h.b16 %v303
    %v1570 = vunpack.c.l.b16 %v304
    %v1571 = vunpack.c.h.b16 %v304
    %v1572 = vunpack.c.l.b16 %v305
    %v1573 = vunpack.c.h.b16 %v305
    %v1574 = vunpack.c.l.b16 %v306
    %v1575 = vunpack.c.h.b16 %v306
    %v1576 = vunpack.c.l.b16 %v307
    %v1577 = vunpack.c.h.b16 %v307
    %v1578 = vunpack.c.l.b16 %v308
    %v1579 = vunpack.c.h.b16 %v308
    %v1580 = vunpack.c.l.b16 %v309
    %v1581 = vunpack.c.h.b16 %v309
    %v1582 = vunpack.c.l.b16 %v310
    %v1583 = vunpack.c.h.b16 %v310
    %v1584 = vunpack.c.l.b16 %v311
    %v1585 = vunpack.c.h.b16 %v311
    %v1586 = vunpack.c.l.b16 %v312
    %v1587 = vunpack.c.h.b16 %v312
    %v1588 = vunpack.c.l.b16 %v313
    %v1589 = vunpack.c.h.b16 %v313
    %v1590 = vunpack.c.l.b16 %v314
    %v1591 = vunpack.c.h.b16 %v314
    %v1592 = vunpack.c.l.b16 %v315
    %v1593 = vunpack.c.h.b16 %v315
    %v1594 = vunpack.c.l.b16 %v316
    %v1595 = vunpack.c.h.b16 %v316
    %v1596 = vunpack.c.l.b16 %v317
    %v1597 = vunpack.c.h.b16 %v317
    %v1598 = vunpack.c.l.b16 %v318
    %v1599 = vunpack.c.h.b16 %v318
    %v1600 = vunpack.c.l.b16 %v319
    %v1601 = vunpack.c.h.b16 %v319
    %v1602 = vunpack.c.l.b16 %v320
    %v1603 = vunpack.c.h.b16 %v320
    %v1604 = vunpack.c.l.b16 %v321
    %v1605 = vunpack.c.h.b16 %v321
    %v1606 = vunpack.c.l.b16 %v322
    %v1607 = vunpack.c.h.b16 %v322
    %v1608 = vunpack.c.l.b16 %v323
    %v1609 = vunpack.c.h.b16 %v323
    %v1610 = vunpack.c.l.b16 %v324
    %v1611 = vunpack.c.h.b16 %v324
    %v1612 = vunpack.c.l.b16 %v325
    %v1613 = vunpack.c.h.b16 %v325
    %v1614 = vunpack.c.l.b16 %v326
    %v1615 = vunpack.c.h.b16 %v326
    %v1616 = vunpack.c.l.b16 %v327
    %v1617 = vunpack.c.h.b16 %v327
    %v1618 = vunpack.c.l.b16 %v328
    %v1619 = vunpack.c.h.b16 %v328
    %v1620 = vunpack.c.l.b16 %v329
    %v1621 = vunpack.c.h.b16 %v329
    %v1622 = vunpack.c.l.b16 %v330
    %v1623 = vunpack.c.h.b16 %v330
    %v1624 = vunpack.c.l.b16 %v331
    %v1625 = vunpack.c.h.b16 %v331
    %v1626 = vunpack.c.l.b16 %v332
    %v1627 = vunpack.c.h.b16 %v332
    %v1628 = vunpack.c.l.b16 %v333
    %v1629 = vunpack.c.h.b16 %v333
    %v1630 = vunpack.c.l.b16 %v334
    %v1631 = vunpack.c.h.b16 %v334
    %v1632 = vunpack.c.l.b16 %v335
    %v1633 = vunpack.c.h.b16 %v335
    %v1634 = vunpack.c.l.b16 %v336
    %v1635 = vunpack.c.h.b16 %v336
    %v1636 = vunpack.c.l.b16 %v337
    %v1637 = vunpack.c.h.b16 %v337
    %v1638 = vunpack.c.l.b16 %v338
    %v1639 = vunpack.c.h.b16 %v338
    %v1640 = vunpack.c.l.b16 %v339
    %v1641 = vunpack.c.h.b16 %v339
    %v1642 = vunpack.c.l.b16 %v340
    %v1643 = vunpack.c.h.b16 %v340
    %v1644 = vunpack.c.l.b16 %v341
    %v1645 = vunpack.c.h.b16 %v341
    %v1646 = vunpack.c.l.b16 %v342
    %v1647 = vunpack.c.h.b16 %v342
    %v1648 = vunpack.c.l.b16 %v343
    %v1649 = vunpack.c.h.b16 %v343
    %v1650 = vunpack.c.l.b16 %v344
    %v1651 = vunpack.c.h.b16 %v344
    %v1652 = vunpack.c.l.b16 %v345
    %v1653 = vunpack.c.h.b16 %v345
    %v1654 = vunpack.c.l.b16 %v346
    %v1655 = vunpack.c.h.b16 %v346
    %v1656 = vunpack.c.l.b16 %v347
    %v1657 = vunpack.c.h.b16 %v347
    %v1658 = vunpack.c.l.b16 %v348
    %v1659 = vunpack.c.h.b16 %v348
    %v1660 = vunpack.c.l.b16 %v349
    %v1661 = vunpack.c.h.b16 %v349
    %v1662 = vunpack.c.l.b16 %v350
    %v1663 = vunpack.c.h.b16 %v350
    %v1664 = vunpack.c.l.b16 %v351
    %v1665 = vunpack.c.h.b16 %v351
    %v1666 = vunpack.c.l.b16 %v352
    %v1667 = vunpack.c.h.b16 %v352
    %v1668 = vunpack.c.l.b16 %v353
    %v1669 = vunpack.c.h.b16 %v353
    %v1670 = vunpack.c.l.b16 %v354
    %v1671 = vunpack.c.h.b16 %v354
    %v1672 = vunpack.c.l.b16 %v355
    %v1673 = vunpack.c.h.b16 %v355
    %v1674 = vunpack.c.l.b16 %v356
    %v1675 = vunpack.c.h.b16 %v356
    %v1676 = vunpack.c.l.b16 %v357
    %v1677 = vunpack.c.h.b16 %v357
    %v1678 = vunpack.c.l.b16 %v358
    %v1679 = vunpack.c.h.b16 %v358
    %v1680 = vunpack.c.l.b16 %v359
    %v1681 = vunpack.c.h.b16 %v359
    %v1682 = vunpack.c.l.b16 %v360
    %v1683 = vunpack.c.h.b16 %v360
    %v1684 = vunpack.c.l.b16 %v361
    %v1685 = vunpack.c.h.b16 %v361
    %v1686 = vunpack.c.l.b16 %v362
    %v1687 = vunpack.c.h.b16 %v362
    %v1688 = vunpack.c.l.b16 %v363
    %v1689 = vunpack.c.h.b16 %v363
    %v1690 = vunpack.c.l.b16 %v364
    %v1691 = vunpack.c.h.b16 %v364
    %v1692 = vunpack.c.l.b16 %v365
    %v1693 = vunpack.c.h.b16 %v365
    %v1694 = vunpack.c.l.b16 %v366
    %v1695 = vunpack.c.h.b16 %v366
    %v1696 = vunpack.c.l.b16 %v367
    %v1697 = vunpack.c.h.b16 %v367
    %v1698 = vunpack.c.l.b16 %v368
    %v1699 = vunpack.c.h.b16 %v368
    %v1700 = vunpack.c.l.b16 %v369
    %v1701 = vunpack.c.h.b16 %v369
    %v1702 = vunpack.c.l.b16 %v370
    %v1703 = vunpack.c.h.b16 %v370
    %v1704 = vunpack.c.l.b16 %v371
    %v1705 = vunpack.c.h.b16 %v371
    %v1706 = vunpack.c.l.b16 %v372
    %v1707 = vunpack.c.h.b16 %v372
    %v1708 = vunpack.c.l.b16 %v373
    %v1709 = vunpack.c.h.b16 %v373
    %v1710 = vunpack.c.l.b16 %v374
    %v1711 = vunpack.c.h.b16 %v374
    %v1712 = vunpack.c.l.b16 %v375
    %v1713 = vunpack.c.h.b16 %v375
    %v1714 = vunpack.c.l.b16 %v376
    %v1715 = vunpack.c.h.b16 %v376
    %v1716 = vunpack.c.l.b16 %v377
    %v1717 = vunpack.c.h.b16 %v377
    %v1718 = vunpack.c.l.b16 %v378
    %v1719 = vunpack.c.h.b16 %v378
    %v1720 = vunpack.c.l.b16 %v379
    %v1721 = vunpack.c.h.b16 %v379
    %v1722 = vunpack.c.l.b16 %v380
    %v1723 = vunpack.c.h.b16 %v380
    %v1724 = vunpack.c.l.b16 %v381
    %v1725 = vunpack.c.h.b16 %v381
    %v1726 = vunpack.c.l.b16 %v382
    %v1727 = vunpack.c.h.b16 %v382
    %v1728 = vunpack.c.l.b16 %v383
    %v1729 = vunpack.c.h.b16 %v383
    %v1730 = vunpack.c.l.b16 %v384
    %v1731 = vunpack.c.h.b16 %v384
    %v1732 = vunpack.c.l.b16 %v385
    %v1733 = vunpack.c.h.b16 %v385
    %v1734 = vunpack.c.l.b16 %v386
    %v1735 = vunpack.c.h.b16 %v386
    %v1736 = vunpack.c.l.b16 %v387
    %v1737 = vunpack.c.h.b16 %v387
    %v1738 = vunpack.c.l.b16 %v388
    %v1739 = vunpack.c.h.b16 %v388
    %v1740 = vunpack.c.l.b16 %v389
    %v1741 = vunpack.c.h.b16 %v389
    %v1742 = vunpack.c.l.b16 %v390
    %v1743 = vunpack.c.h.b16 %v390
    %v1744 = vunpack.c.l.b16 %v391
    %v1745 = vunpack.c.h.b16 %v391
    %v1746 = vunpack.c.l.b16 %v392
    %v1747 = vunpack.c.h.b16 %v392
    %v1748 = vunpack.c.l.b16 %v393
    %v1749 = vunpack.c.h.b16 %v393
    %v1750 = vunpack.c.l.b16 %v394
    %v1751 = vunpack.c.h.b16 %v394
    %v1752 = vunpack.c.l.b16 %v395
    %v1753 = vunpack.c.h.b16 %v395
    %v1754 = vunpack.c.l.b16 %v396
    %v1755 = vunpack.c.h.b16 %v396
    %v1756 = vunpack.c.l.b16 %v397
    %v1757 = vunpack.c.h.b16 %v397
    %v1758 = vunpack.c.l.b16 %v398
    %v1759 = vunpack.c.h.b16 %v398
    %v1760 = vunpack.c.l.b16 %v399
    %v1761 = vunpack.c.h.b16 %v399
    %v1762 = vunpack.c.l.b16 %v400
    %v1763 = vunpack.c.h.b16 %v400
    %v1764 = vunpack.c.l.b16 %v401
    %v1765 = vunpack.c.h.b16 %v401
    %v1766 = vunpack.c.l.b16 %v402
    %v1767 = vunpack.c.h.b16 %v402
    %v1768 = vunpack.c.l.b16 %v403
    %v1769 = vunpack.c.h.b16 %v403
    %v1770 = vunpack.c.l.b16 %v404
    %v1771 = vunpack.c.h.b16 %v404
    %v1772 = vunpack.c.l.b16 %v405
    %v1773 = vunpack.c.h.b16 %v405
    %v1774 = vunpack.c.l.b16 %v406
    %v1775 = vunpack.c.h.b16 %v406
    %v1776 = vunpack.c.l.b16 %v407
    %v1777 = vunpack.c.h.b16 %v407
    %v1778 = vunpack.c.l.b16 %v408
    %v1779 = vunpack.c.h.b16 %v408
    %v1780 = vunpack.c.l.b16 %v409
    %v1781 = vunpack.c.h.b16 %v409
    %v1782 = vunpack.c.l.b16 %v410
    %v1783 = vunpack.c.h.b16 %v410
    %v1784 = vunpack.c.l.b16 %v411
    %v1785 = vunpack.c.h.b16 %v411
    %v1786 = vunpack.c.l.b16 %v412
    %v1787 = vunpack.c.h.b16 %v412
    %v1788 = vunpack.c.l.b16 %v413
    %v1789 = vunpack.c.h.b16 %v413
    %v1790 = vunpack.c.l.b16 %v414
    %v1791 = vunpack.c.h.b16 %v414
    %v1792 = vunpack.c.l.b16 %v415
    %v1793 = vunpack.c.h.b16 %v415
    %v1794 = vunpack.c.l.b16 %v416
    %v1795 = vunpack.c.h.b16 %v416
    %v1796 = vunpack.c.l.b16 %v417
    %v1797 = vunpack.c.h.b16 %v417
    %v1798 = vunpack.c.l.b16 %v418
    %v1799 = vunpack.c.h.b16 %v418
    %v1800 = vunpack.c.l.b16 %v419
    %v1801 = vunpack.c.h.b16 %v419
    %v1802 = vunpack.c.l.b16 %v420
    %v1803 = vunpack.c.h.b16 %v420
    %v1804 = vunpack.c.l.b16 %v421
    %v1805 = vunpack.c.h.b16 %v421
    %v1806 = vunpack.c.l.b16 %v422
    %v1807 = vunpack.c.h.b16 %v422
    %v1808 = vunpack.c.l.b16 %v423
    %v1809 = vunpack.c.h.b16 %v423
    %v1810 = vunpack.c.l.b16 %v424
    %v1811 = vunpack.c.h.b16 %v424
    %v1812 = vunpack.c.l.b16 %v425
    %v1813 = vunpack.c.h.b16 %v425
    %v1814 = vunpack.c.l.b16 %v426
    %v1815 = vunpack.c.h.b16 %v426
    %v1816 = vunpack.c.l.b16 %v427
    %v1817 = vunpack.c.h.b16 %v427
    %v1818 = vunpack.c.l.b16 %v428
    %v1819 = vunpack.c.h.b16 %v428
    %v1820 = vunpack.c.l.b16 %v429
    %v1821 = vunpack.c.h.b16 %v429
    %v1822 = vunpack.c.l.b16 %v430
    %v1823 = vunpack.c.h.b16 %v430
    %v1824 = vunpack.c.l.b16 %v431
    %v1825 = vunpack.c.h.b16 %v431
    %v1826 = vunpack.c.l.b16 %v432
    %v1827 = vunpack.c.h.b16 %v432
    %v1828 = vunpack.c.l.b16 %v433
    %v1829 = vunpack.c.h.b16 %v433
    %v1830 = vunpack.c.l.b16 %v434
    %v1831 = vunpack.c.h.b16 %v434
    %v1832 = vunpack.c.l.b16 %v435
    %v1833 = vunpack.c.h.b16 %v435
    %v1834 = vunpack.c.l.b16 %v436
    %v1835 = vunpack.c.h.b16 %v436
    %v1836 = vunpack.c.l.b16 %v437
    %v1837 = vunpack.c.h.b16 %v437
    %v1838 = vunpack.c.l.b16 %v438
    %v1839 = vunpack.c.h.b16 %v438
    %v1840 = vunpack.c.l.b16 %v439
    %v1841 = vunpack.c.h.b16 %v439
    %v1842 = vunpack.c.l.b16 %v440
    %v1843 = vunpack.c.h.b16 %v440
    %v1844 = vunpack.c.l.b16 %v441
    %v1845 = vunpack.c.h.b16 %v441
    %v1846 = vunpack.c.l.b16 %v442
    %v1847 = vunpack.c.h.b16 %v442
    %v1848 = vunpack.c.l.b16 %v443
    %v1849 = vunpack.c.h.b16 %v443
    %v1850 = vunpack.c.l.b16 %v444
    %v1851 = vunpack.c.h.b16 %v444
    %v1852 = vunpack.c.l.b16 %v445
    %v1853 = vunpack.c.h.b16 %v445
    %v1854 = vunpack.c.l.b16 %v446
    %v1855 = vunpack.c.h.b16 %v446
    %v1856 = vunpack.c.l.b16 %v447
    %v1857 = vunpack.c.h.b16 %v447
    %v1858 = vunpack.c.l.b16 %v448
    %v1859 = vunpack.c.h.b16 %v448
    %v1860 = vunpack.c.l.b16 %v449
    %v1861 = vunpack.c.h.b16 %v449
    %v1862 = vunpack.c.l.b16 %v450
    %v1863 = vunpack.c.h.b16 %v450
    %v1864 = vunpack.c.l.b16 %v451
    %v1865 = vunpack.c.h.b16 %v451
    %v1866 = vunpack.c.l.b16 %v452
    %v1867 = vunpack.c.h.b16 %v452
    %v1868 = vunpack.c.l.b16 %v453
    %v1869 = vunpack.c.h.b16 %v453
    %v1870 = vunpack.c.l.b16 %v454
    %v1871 = vunpack.c.h.b16 %v454
    %v1872 = vunpack.c.l.b16 %v455
    %v1873 = vunpack.c.h.b16 %v455
    %v1874 = vunpack.c.l.b16 %v456
    %v1875 = vunpack.c.h.b16 %v456
    %v1876 = vunpack.c.l.b16 %v457
    %v1877 = vunpack.c.h.b16 %v457
    %v1878 = vunpack.c.l.b16 %v458
    %v1879 = vunpack.c.h.b16 %v458
    %v1880 = vunpack.c.l.b16 %v459
    %v1881 = vunpack.c.h.b16 %v459
    %v1882 = vunpack.c.l.b16 %v460
    %v1883 = vunpack.c.h.b16 %v460
    %v1884 = vunpack.c.l.b16 %v461
    %v1885 = vunpack.c.h.b16 %v461
    %v1886 = vunpack.c.l.b16 %v462
    %v1887 = vunpack.c.h.b16 %v462
    %v1888 = vunpack.c.l.b16 %v463
    %v1889 = vunpack.c.h.b16 %v463
    %v1890 = vunpack.c.l.b16 %v464
    %v1891 = vunpack.c.h.b16 %v464
    %v1892 = vunpack.c.l.b16 %v465
    %v1893 = vunpack.c.h.b16 %v465
    %v1894 = vunpack.c.l.b16 %v466
    %v1895 = vunpack.c.h.b16 %v466
    %v1896 = vunpack.c.l.b16 %v467
    %v1897 = vunpack.c.h.b16 %v467
    %v1898 = vunpack.c.l.b16 %v468
    %v1899 = vunpack.c.h.b16 %v468
    %v1900 = vunpack.c.l.b16 %v469
    %v1901 = vunpack.c.h.b16 %v469
    %v1902 = vunpack.c.l.b16 %v470
    %v1903 = vunpack.c.h.b16 %v470
    %v1904 = vunpack.c.l.b16 %v471
    %v1905 = vunpack.c.h.b16 %v471
    %v1906 = vunpack.c.l.b16 %v472
    %v1907 = vunpack.c.h.b16 %v472
    %v1908 = vunpack.c.l.b16 %v473
    %v1909 = vunpack.c.h.b16 %v473
    %v1910 = vunpack.c.l.b16 %v474
    %v1911 = vunpack.c.h.b16 %v474
    %v1912 = vunpack.c.l.b16 %v475
    %v1913 = vunpack.c.h.b16 %v475
    %v1914 = vunpack.c.l.b16 %v476
    %v1915 = vunpack.c.h.b16 %v476
    %v1916 = vunpack.c.l.b16 %v477
    %v1917 = vunpack.c.h.b16 %v477
    %v1918 = vunpack.c.l.b16 %v478
    %v1919 = vunpack.c.h.b16 %v478
    %v1920 = vunpack.c.l.b16 %v479
    %v1921 = vunpack.c.h.b16 %v479
    %v1922 = vunpack.c.l.b16 %v480
    %v1923 = vunpack.c.h.b16 %v480
    %v1924 = vunpack.c.l.b16 %v481
    %v1925 = vunpack.c.h.b16 %v481
    %v1926 = vunpack.c.l.b16 %v482
    %v1927 = vunpack.c.h.b16 %v482
    %v1928 = vunpack.c.l.b16 %v483
    %v1929 = vunpack.c.h.b16 %v483
    %v1930 = vunpack.c.l.b16 %v484
    %v1931 = vunpack.c.h.b16 %v484
    %v1932 = vunpack.c.l.b16 %v485
    %v1933 = vunpack.c.h.b16 %v485
    %v1934 = vunpack.c.l.b16 %v486
    %v1935 = vunpack.c.h.b16 %v486
    %v1936 = vunpack.c.l.b16 %v487
    %v1937 = vunpack.c.h.b16 %v487
    %v1938 = vunpack.c.l.b16 %v488
    %v1939 = vunpack.c.h.b16 %v488
    %v1940 = vunpack.c.l.b16 %v489
    %v1941 = vunpack.c.h.b16 %v489
    %v1942 = vunpack.c.l.b16 %v490
    %v1943 = vunpack.c.h.b16 %v490
    %v1944 = vunpack.c.l.b16 %v491
    %v1945 = vunpack.c.h.b16 %v491
    %v1946 = vunpack.c.l.b16 %v492
    %v1947 = vunpack.c.h.b16 %v492
    %v1948 = vunpack.c.l.b16 %v493
    %v1949 = vunpack.c.h.b16 %v493
    %v1950 = vunpack.c.l.b16 %v494
    %v1951 = vunpack.c.h.b16 %v494
    %v1952 = vunpack.c.l.b16 %v495
    %v1953 = vunpack.c.h.b16 %v495
    %v1954 = vunpack.c.l.b16 %v496
    %v1955 = vunpack.c.h.b16 %v496
    %v1956 = vunpack.c.l.b16 %v497
    %v1957 = vunpack.c.h.b16 %v497
    %v1958 = vunpack.c.l.b16 %v498
    %v1959 = vunpack.c.h.b16 %v498
    %v1960 = vunpack.c.l.b16 %v499
    %v1961 = vunpack.c.h.b16 %v499
    %v1962 = vunpack.c.l.b16 %v500
    %v1963 = vunpack.c.h.b16 %v500
    %v1964 = vunpack.c.l.b16 %v501
    %v1965 = vunpack.c.h.b16 %v501
    %v1966 = vunpack.c.l.b16 %v502
    %v1967 = vunpack.c.h.b16 %v502
    %v1968 = vunpack.c.l.b16 %v503
    %v1969 = vunpack.c.h.b16 %v503
    %v1970 = vunpack.c.l.b16 %v504
    %v1971 = vunpack.c.h.b16 %v504
    %v1972 = vunpack.c.l.b16 %v505
    %v1973 = vunpack.c.h.b16 %v505
    %v1974 = vunpack.c.l.b16 %v506
    %v1975 = vunpack.c.h.b16 %v506
    %v1976 = vunpack.c.l.b16 %v507
    %v1977 = vunpack.c.h.b16 %v507
    %v1978 = vunpack.c.l.b16 %v508
    %v1979 = vunpack.c.h.b16 %v508
    %v1980 = vunpack.c.l.b16 %v509
    %v1981 = vunpack.c.h.b16 %v509
    %v1982 = vunpack.c.l.b16 %v510
    %v1983 = vunpack.c.h.b16 %v510
    %v1984 = vunpack.c.l.b16 %v511
    %v1985 = vunpack.c.h.b16 %v511
    %v1986 = vunpack.c.l.b16 %v512
    %v1987 = vunpack.c.h.b16 %v512
    %v1988 = vunpack.c.l.b16 %v513
    %v1989 = vunpack.c.h.b16 %v513
    %v1990 = vunpack.c.l.b16 %v514
    %v1991 = vunpack.c.h.b16 %v514
    %v1992 = vunpack.c.l.b16 %v515
    %v1993 = vunpack.c.h.b16 %v515
    %v1994 = vunpack.c.l.b16 %v516
    %v1995 = vunpack.c.h.b16 %v516
    %v1996 = vunpack.c.l.b16 %v517
    %v1997 = vunpack.c.h.b16 %v517
    %v1998 = vunpack.c.l.b16 %v518
    %v1999 = vunpack.c.h.b16 %v518
    %v2000 = vunpack.c.l.b16 %v519
    %v2001 = vunpack.c.h.b16 %v519
    %v2002 = vunpack.c.l.b16 %v520
    %v2003 = vunpack.c.h.b16 %v520
    %v2004 = vunpack.c.l.b16 %v521
    %v2005 = vunpack.c.h.b16 %v521
    %v2006 = vunpack.c.l.b16 %v522
    %v2007 = vunpack.c.h.b16 %v522
    %v2008 = vunpack.c.l.b16 %v523
    %v2009 = vunpack.c.h.b16 %v523
    %v2010 = vunpack.c.l.b16 %v524
    %v2011 = vunpack.c.h.b16 %v524
    %v2012 = vunpack.c.l.b16 %v525
    %v2013 = vunpack.c.h.b16 %v525
    %v2014 = vunpack.c.l.b16 %v526
    %v2015 = vunpack.c.h.b16 %v526
    %v2016 = vunpack.c.l.b16 %v527
    %v2017 = vunpack.c.h.b16 %v527
    %v2018 = vunpack.c.l.b16 %v528
    %v2019 = vunpack.c.h.b16 %v528
    %v2020 = vunpack.c.l.b16 %v529
    %v2021 = vunpack.c.h.b16 %v529
    %v2022 = vunpack.c.l.b16 %v530
    %v2023 = vunpack.c.h.b16 %v530
    %v2024 = vunpack.c.l.b16 %v531
    %v2025 = vunpack.c.h.b16 %v531
    %v2026 = vunpack.c.l.b16 %v532
    %v2027 = vunpack.c.h.b16 %v532
    %v2028 = vunpack.c.l.b16 %v533
    %v2029 = vunpack.c.h.b16 %v533
    %v2030 = vunpack.c.l.b16 %v534
    %v2031 = vunpack.c.h.b16 %v534
    %v2032 = vunpack.c.l.b16 %v535
    %v2033 = vunpack.c.h.b16 %v535
    %v2034 = vunpack.c.l.b16 %v536
    %v2035 = vunpack.c.h.b16 %v536
    %v2036 = vunpack.c.l.b16 %v537
    %v2037 = vunpack.c.h.b16 %v537
    %v2038 = vunpack.c.l.b16 %v538
    %v2039 = vunpack.c.h.b16 %v538
    %v2040 = vunpack.c.l.b16 %v539
    %v2041 = vunpack.c.h.b16 %v539
    %v2042 = vunpack.c.l.b16 %v540
    %v2043 = vunpack.c.h.b16 %v540
    %v2044 = vunpack.c.l.b16 %v541
    %v2045 = vunpack.c.h.b16 %v541
    %v2046 = vunpack.c.l.b16 %v542
    %v2047 = vunpack.c.h.b16 %v542
    %v2048 = vunpack.c.l.b16 %v543
    %v2049 = vunpack.c.h.b16 %v543
    %v2050 = vunpack.c.l.b16 %v544
    %v2051 = vunpack.c.h.b16 %v544
    %v2052 = vunpack.c.l.b16 %v545
    %v2053 = vunpack.c.h.b16 %v545
    %v2054 = vunpack.c.l.b16 %v546
    %v2055 = vunpack.c.h.b16 %v546
    %v2056 = vunpack.c.l.b16 %v547
    %v2057 = vunpack.c.h.b16 %v547
    %v2058 = vunpack.c.l.b16 %v548
    %v2059 = vunpack.c.h.b16 %v548
    %v2060 = vunpack.c.l.b16 %v549
    %v2061 = vunpack.c.h.b16 %v549
    %v2062 = vunpack.c.l.b16 %v550
    %v2063 = vunpack.c.h.b16 %v550
    %v2064 = vunpack.c.l.b16 %v551
    %v2065 = vunpack.c.h.b16 %v551
    %v2066 = vunpack.c.l.b16 %v552
    %v2067 = vunpack.c.h.b16 %v552
    %v2068 = vunpack.c.l.b16 %v553
    %v2069 = vunpack.c.h.b16 %v553
    %v2070 = vunpack.c.l.b16 %v554
    %v2071 = vunpack.c.h.b16 %v554
    %v2072 = vunpack.c.l.b16 %v555
    %v2073 = vunpack.c.h.b16 %v555
    %v2074 = vunpack.c.l.b16 %v556
    %v2075 = vunpack.c.h.b16 %v556
    %v2076 = vunpack.c.l.b16 %v557
    %v2077 = vunpack.c.h.b16 %v557
    %v2078 = vunpack.c.l.b16 %v558
    %v2079 = vunpack.c.h.b16 %v558
    %v2080 = vunpack.c.l.b16 %v559
    %v2081 = vunpack.c.h.b16 %v559
    %v2082 = vunpack.c.l.b16 %v560
    %v2083 = vunpack.c.h.b16 %v560
    %v2084 = vunpack.c.l.b16 %v561
    %v2085 = vunpack.c.h.b16 %v561
    %v2086 = vunpack.c.l.b16 %v562
    %v2087 = vunpack.c.h.b16 %v562
    %v2088 = vunpack.c.l.b16 %v563
    %v2089 = vunpack.c.h.b16 %v563
    %v2090 = vunpack.c.l.b16 %v564
    %v2091 = vunpack.c.h.b16 %v564
    %v2092 = vunpack.c.l.b16 %v565
    %v2093 = vunpack.c.h.b16 %v565
    %v2094 = vunpack.c.l.b16 %v566
    %v2095 = vunpack.c.h.b16 %v566
    %v2096 = vunpack.c.l.b16 %v567
    %v2097 = vunpack.c.h.b16 %v567
    %v2098 = vunpack.c.l.b16 %v568
    %v2099 = vunpack.c.h.b16 %v568
    %v2100 = vunpack.c.l.b16 %v569
    %v2101 = vunpack.c.h.b16 %v569
    %v2102 = vunpack.c.l.b16 %v570
    %v2103 = vunpack.c.h.b16 %v570
    %v2104 = vunpack.c.l.b16 %v571
    %v2105 = vunpack.c.h.b16 %v571
    %v2106 = vunpack.c.l.b16 %v572
    %v2107 = vunpack.c.h.b16 %v572
    %v2108 = vunpack.c.l.b16 %v573
    %v2109 = vunpack.c.h.b16 %v573
    %v2110 = vunpack.c.l.b16 %v574
    %v2111 = vunpack.c.h.b16 %v574
    %v2112 = vunpack.c.l.b16 %v575
    %v2113 = vunpack.c.h.b16 %v575
    %v2114 = vunpack.c.l.b16 %v576
    %v2115 = vunpack.c.h.b16 %v576
    %v2116 = vunpack.c.l.b16 %v577
    %v2117 = vunpack.c.h.b16 %v577
    %v2118 = vunpack.c.l.b16 %v578
    %v2119 = vunpack.c.h.b16 %v578
    %v2120 = vunpack.c.l.b16 %v579
    %v2121 = vunpack.c.h.b16 %v579
    %v2122 = vunpack.c.l.b16 %v580
    %v2123 = vunpack.c.h.b16 %v580
    %v2124 = vunpack.c.l.b16 %v581
    %v2125 = vunpack.c.h.b16 %v581
    %v2126 = vunpack.c.l.b16 %v582
    %v2127 = vunpack.c.h.b16 %v582
    %v2128 = vunpack.c.l.b16 %v583
    %v2129 = vunpack.c.h.b16 %v583
    %v2130 = vunpack.c.l.b16 %v584
    %v2131 = vunpack.c.h.b16 %v584
    %v2132 = vunpack.c.l.b16 %v585
    %v2133 = vunpack.c.h.b16 %v585
    %v2134 = vunpack.c.l.b16 %v586
    %v2135 = vunpack.c.h.b16 %v586
    %v2136 = vunpack.c.l.b16 %v587
    %v2137 = vunpack.c.h.b16 %v587
    %v2138 = vunpack.c.l.b16 %v588
    %v2139 = vunpack.c.h.b16 %v588
    %v2140 = vunpack.c.l.b16 %v589
    %v2141 = vunpack.c.h.b16 %v589
    %v2142 = vunpack.c.l.b16 %v590
    %v2143 = vunpack.c.h.b16 %v590
    %v2144 = vunpack.c.l.b16 %v591
    %v2145 = vunpack.c.h.b16 %v591
    %v2146 = vunpack.c.l.b16 %v592
    %v2147 = vunpack.c.h.b16 %v592
    %v2148 = vunpack.c.l.b16 %v593
    %v2149 = vunpack.c.h.b16 %v593
    %v2150 = vunpack.c.l.b16 %v594
    %v2151 = vunpack.c.h.b16 %v594
    %v2152 = vunpack.c.l.b16 %v595
    %v2153 = vunpack.c.h.b16 %v595
    %v2154 = vpack.c.b16 %v1134, %v1130
    %v2155 = vpack.c.b16 %v1135, %v1131
    %v2156 = vpack.c.b16 %v1136, %v1132
    %v2157 = vpack.c.b16 %v1137, %v1133
    %v2158 = vpack.c.b16 %v1142, %v1138
    %v2159 = vpack.c.b16 %v1143, %v1139
    %v2160 = vpack.c.b16 %v1144, %v1140
    %v2161 = vpack.c.b16 %v1145, %v1141
    %v2162 = vpack.c.b16 %v1150, %v1146
    %v2163 = vpack.c.b16 %v1151, %v1147
    %v2164 = vpack.c.b16 %v1152, %v1148
    %v2165 = vpack.c.b16 %v1153, %v1149
    %v2166 = vpack.c.b16 %v1158, %v1154
    %v2167 = vpack.c.b16 %v1159, %v1155
    %v2168 = vpack.c.b16 %v1160, %v1156
    %v2169 = vpack.c.b16 %v1161, %v1157
    %v2170 = vpack.c.b16 %v1166, %v1162
    %v2171 = vpack.c.b16 %v1167, %v1163
    %v2172 = vpack.c.b16 %v1168, %v1164
    %v2173 = vpack.c.b16 %v1169, %v1165
    %v2174 = vpack.c.b16 %v1174, %v1170
    %v2175 = vpack.c.b16 %v1175, %v1171
    %v2176 = vpack.c.b16 %v1176, %v1172
    %v2177 = vpack.c.b16 %v1177, %v1173
    %v2178 = vpack.c.b16 %v1182, %v1178
    %v2179 = vpack.c.b16 %v1183, %v1179
    %v2180 = vpack.c.b16 %v1184, %v1180
    %v2181 = vpack.c.b16 %v1185, %v1181
    %v2182 = vpack.c.b16 %v1190, %v1186
    %v2183 = vpack.c.b16 %v1191, %v1187
    %v2184 = vpack.c.b16 %v1192, %v1188
    %v2185 = vpack.c.b16 %v1193, %v1189
    %v2186 = vpack.c.b16 %v1198, %v1194
    %v2187 = vpack.c.b16 %v1199, %v1195
    %v2188 = vpack.c.b16 %v1200, %v1196
    %v2189 = vpack.c.b16 %v1201, %v1197
    %v2190 = vpack.c.b16 %v1206, %v1202
    %v2191 = vpack.c.b16 %v1207, %v1203
    %v2192 = vpack.c.b16 %v1208, %v1204
    %v2193 = vpack.c.b16 %v1209, %v1205
    %v2194 = vpack.c.b16 %v1214, %v1210
    %v2195 = vpack.c.b16 %v1215, %v1211
    %v2196 = vpack.c.b16 %v1216, %v1212
    %v2197 = vpack.c.b16 %v1217, %v1213
    %v2198 = vpack.c.b16 %v1222, %v1218
    %v2199 = vpack.c.b16 %v1223, %v1219
    %v2200 = vpack.c.b16 %v1224, %v1220
    %v2201 = vpack.c.b16 %v1225, %v1221
    %v2202 = vpack.c.b16 %v1230, %v1226
    %v2203 = vpack.c.b16 %v1231, %v1227
    %v2204 = vpack.c.b16 %v1232, %v1228
    %v2205 = vpack.c.b16 %v1233, %v1229
    %v2206 = vpack.c.b16 %v1238, %v1234
    %v2207 = vpack.c.b16 %v1239, %v1235
    %v2208 = vpack.c.b16 %v1240, %v1236
    %v2209 = vpack.c.b16 %v1241, %v1237
    %v2210 = vpack.c.b16 %v1246, %v1242
    %v2211 = vpack.c.b16 %v1247, %v1243
    %v2212 = vpack.c.b16 %v1248, %v1244
    %v2213 = vpack.c.b16 %v1249, %v1245
    %v2214 = vpack.c.b16 %v1254, %v1250
    %v2215 = vpack.c.b16 %v1255, %v1251
    %v2216 = vpack.c.b16 %v1256, %v1252
    %v2217 = vpack.c.b16 %v1257, %v1253
    %v2218 = vpack.c.b16 %v1262, %v1258
    %v2219 = vpack.c.b16 %v1263, %v1259
    %v2220 = vpack.c.b16 %v1264, %v1260
    %v2221 = vpack.c.b16 %v1265, %v1261
    %v2222 = vpack.c.b16 %v1270, %v1266
    %v2223 = vpack.c.b16 %v1271, %v1267
    %v2224 = vpack.c.b16 %v1272, %v1268
    %v2225 = vpack.c.b16 %v1273, %v1269
    %v2226 = vpack.c.b16 %v1278, %v1274
    %v2227 = vpack.c.b16 %v1279, %v1275
    %v2228 = vpack.c.b16 %v1280, %v1276
    %v2229 = vpack.c.b16 %v1281, %v1277
    %v2230 = vpack.c.b16 %v1286, %v1282
    %v2231 = vpack.c.b16 %v1287, %v1283
    %v2232 = vpack.c.b16 %v1288, %v1284
    %v2233 = vpack.c.b16 %v1289, %v1285
    %v2234 = vpack.c.b16 %v1294, %v1290
    %v2235 = vpack.c.b16 %v1295, %v1291
    %v2236 = vpack.c.b16 %v1296, %v1292
    %v2237 = vpack.c.b16 %v1297, %v1293
    %v2238 = vpack.c.b16 %v1302, %v1298
    %v2239 = vpack.c.b16 %v1303, %v1299
    %v2240 = vpack.c.b16 %v1304, %v1300
    %v2241 = vpack.c.b16 %v1305, %v1301
    %v2242 = vpack.c.b16 %v1310, %v1306
    %v2243 = vpack.c.b16 %v1311, %v1307
    %v2244 = vpack.c.b16 %v1312, %v1308
    %v2245 = vpack.c.b16 %v1313, %v1309
    %v2246 = vpack.c.b16 %v1318, %v1314
    %v2247 = vpack.c.b16 %v1319, %v1315
    %v2248 = vpack.c.b16 %v1320, %v1316
    %v2249 = vpack.c.b16 %v1321, %v1317
    %v2250 = vpack.c.b16 %v1326, %v1322
    %v2251 = vpack.c.b16 %v1327, %v1323
    %v2252 = vpack.c.b16 %v1328, %v1324
    %v2253 = vpack.c.b16 %v1329, %v1325
    %v2254 = vpack.c.b16 %v1334, %v1330
    %v2255 = vpack.c.b16 %v1335, %v1331
    %v2256 = vpack.c.b16 %v1336, %v1332
    %v2257 = vpack.c.b16 %v1337, %v1333
    %v2258 = vpack.c.b16 %v1342, %v1338
    %v2259 = vpack.c.b16 %v1343, %v1339
    %v2260 = vpack.c.b16 %v1344, %v1340
    %v2261 = vpack.c.b16 %v1345, %v1341
    %v2262 = vpack.c.b16 %v1350, %v1346
    %v2263 = vpack.c.b16 %v1351, %v1347
    %v2264 = vpack.c.b16 %v1352, %v1348
    %v2265 = vpack.c.b16 %v1353, %v1349
    %v2266 = vpack.c.b16 %v1358, %v1354
    %v2267 = vpack.c.b16 %v1359, %v1355
    %v2268 = vpack.c.b16 %v1360, %v1356
    %v2269 = vpack.c.b16 %v1361, %v1357
    %v2270 = vpack.c.b16 %v1366, %v1362
    %v2271 = vpack.c.b16 %v1367, %v1363
    %v2272 = vpack.c.b16 %v1368, %v1364
    %v2273 = vpack.c.b16 %v1369, %v1365
    %v2274 = vpack.c.b16 %v1374, %v1370
    %v2275 = vpack.c.b16 %v1375, %v1371
    %v2276 = vpack.c.b16 %v1376, %v1372
    %v2277 = vpack.c.b16 %v1377, %v1373
    %v2278 = vpack.c.b16 %v1382, %v1378
    %v2279 = vpack.c.b16 %v1383, %v1379
    %v2280 = vpack.c.b16 %v1384, %v1380
    %v2281 = vpack.c.b16 %v1385, %v1381
    %v2282 = vpack.c.b16 %v1390, %v1386
    %v2283 = vpack.c.b16 %v1391, %v1387
    %v2284 = vpack.c.b16 %v1392, %v1388
    %v2285 = vpack.c.b16 %v1393, %v1389
    %v2286 = vpack.c.b16 %v1398, %v1394
    %v2287 = vpack.c.b16 %v1399, %v1395
    %v2288 = vpack.c.b16 %v1400, %v1396
    %v2289 = vpack.c.b16 %v1401, %v1397
    %v2290 = vpack.c.b16 %v1406, %v1402
    %v2291 = vpack.c.b16 %v1407, %v1403
    %v2292 = vpack.c.b16 %v1408, %v1404
    %v2293 = vpack.c.b16 %v1409, %v1405
    %v2294 = vpack.c.b16 %v1414, %v1410
    %v2295 = vpack.c.b16 %v1415, %v1411
    %v2296 = vpack.c.b16 %v1416, %v1412
    %v2297 = vpack.c.b16 %v1417, %v1413
    %v2298 = vpack.c.b16 %v1422, %v1418
    %v2299 = vpack.c.b16 %v1423, %v1419
    %v2300 = vpack.c.b16 %v1424, %v1420
    %v2301 = vpack.c.b16 %v1425, %v1421
    %v2302 = vpack.c.b16 %v1430, %v1426
    %v2303 = vpack.c.b16 %v1431, %v1427
    %v2304 = vpack.c.b16 %v1432, %v1428
    %v2305 = vpack.c.b16 %v1433, %v1429
    %v2306 = vpack.c.b16 %v1438, %v1434
    %v2307 = vpack.c.b16 %v1439, %v1435
    %v2308 = vpack.c.b16 %v1440, %v1436
    %v2309 = vpack.c.b16 %v1441, %v1437
    %v2310 = vpack.c.b16 %v1446, %v1442
    %v2311 = vpack.c.b16 %v1447, %v1443
    %v2312 = vpack.c.b16 %v1448, %v1444
    %v2313 = vpack.c.b16 %v1449, %v1445
    %v2314 = vpack.c.b16 %v1454, %v1450
    %v2315 = vpack.c.b16 %v1455, %v1451
    %v2316 = vpack.c.b16 %v1456, %v1452
    %v2317 = vpack.c.b16 %v1457, %v1453
    %v2318 = vpack.c.b16 %v1462, %v1458
    %v2319 = vpack.c.b16 %v1463, %v1459
    %v2320 = vpack.c.b16 %v1464, %v1460
    %v2321 = vpack.c.b16 %v1465, %v1461
    %v2322 = vpack.c.b16 %v1470, %v1466
    %v2323 = vpack.c.b16 %v1471, %v1467
    %v2324 = vpack.c.b16 %v1472, %v1468
    %v2325 = vpack.c.b16 %v1473, %v1469
    %v2326 = vpack.c.b16 %v1478, %v1474
    %v2327 = vpack.c.b16 %v1479, %v1475
    %v2328 = vpack.c.b16 %v1480, %v1476
    %v2329 = vpack.c.b16 %v1481, %v1477
    %v2330 = vpack.c.b16 %v1486, %v1482
    %v2331 = vpack.c.b16 %v1487, %v1483
    %v2332 = vpack.c.b16 %v1488, %v1484
    %v2333 = vpack.c.b16 %v1489, %v1485
    %v2334 = vpack.c.b16 %v1494, %v1490
    %v2335 = vpack.c.b16 %v1495, %v1491
    %v2336 = vpack.c.b16 %v1496, %v1492
    %v2337 = vpack.c.b16 %v1497, %v1493
    %v2338 = vpack.c.b16 %v1502, %v1498
    %v2339 = vpack.c.b16 %v1503, %v1499
    %v2340 = vpack.c.b16 %v1504, %v1500
    %v2341 = vpack.c.b16 %v1505, %v1501
    %v2342 = vpack.c.b16 %v1510, %v1506
    %v2343 = vpack.c.b16 %v1511, %v1507
    %v2344 = vpack.c.b16 %v1512, %v1508
    %v2345 = vpack.c.b16 %v1513, %v1509
    %v2346 = vpack.c.b16 %v1518, %v1514
    %v2347 = vpack.c.b16 %v1519, %v1515
    %v2348 = vpack.c.b16 %v1520, %v1516
    %v2349 = vpack.c.b16 %v1521, %v1517
    %v2350 = vpack.c.b16 %v1526, %v1522
    %v2351 = vpack.c.b16 %v1527, %v1523
    %v2352 = vpack.c.b16 %v1528, %v1524
    %v2353 = vpack.c.b16 %v1529, %v1525
    %v2354 = vpack.c.b16 %v1534, %v1530
    %v2355 = vpack.c.b16 %v1535, %v1531
    %v2356 = vpack.c.b16 %v1536, %v1532
    %v2357 = vpack.c.b16 %v1537, %v1533
    %v2358 = vpack.c.b16 %v1542, %v1538
    %v2359 = vpack.c.b16 %v1543, %v1539
    %v2360 = vpack.c.b16 %v1544, %v1540
    %v2361 = vpack.c.b16 %v1545, %v1541
    %v2362 = vpack.c.b16 %v1550, %v1546
    %v2363 = vpack.c.b16 %v1551, %v1547
    %v2364 = vpack.c.b16 %v1552, %v1548
    %v2365 = vpack.c.b16 %v1553, %v1549
    %v2366 = vpack.c.b16 %v1558, %v1554
    %v2367 = vpack.c.b16 %v1559, %v1555
    %v2368 = vpack.c.b16 %v1560, %v1556
    %v2369 = vpack.c.b16 %v1561, %v1557
    %v2370 = vpack.c.b16 %v1566, %v1562
    %v2371 = vpack.c.b16 %v1567, %v1563
    %v2372 = vpack.c.b16 %v1568, %v1564
    %v2373 = vpack.c.b16 %v1569, %v1565
    %v2374 = vpack.c.b16 %v1574, %v1570
    %v2375 = vpack.c.b16 %v1575, %v1571
    %v2376 = vpack.c.b16 %v1576, %v1572
    %v2377 = vpack.c.b16 %v1577, %v1573
    %v2378 = vpack.c.b16 %v1582, %v1578
    %v2379 = vpack.c.b16 %v1583, %v1579
    %v2380 = vpack.c.b16 %v1584, %v1580
    %v2381 = vpack.c.b16 %v1585, %v1581
    %v2382 = vpack.c.b16 %v1590, %v1586
    %v2383 = vpack.c.b16 %v1591, %v1587
    %v2384 = vpack.c.b16 %v1592, %v1588
    %v2385 = vpack.c.b16 %v1593, %v1589
    %v2386 = vpack.c.b16 %v1598, %v1594
    %v2387 = vpack.c.b16 %v1599, %v1595
    %v2388 = vpack.c.b16 %v1600, %v1596
    %v2389 = vpack.c.b16 %v1601, %v1597
    %v2390 = vpack.c.b16 %v1606, %v1602
    %v2391 = vpack.c.b16 %v1607, %v1603
    %v2392 = vpack.c.b16 %v1608, %v1604
    %v2393 = vpack.c.b16 %v1609, %v1605
    %v2394 = vpack.c.b16 %v1614, %v1610
    %v2395 = vpack.c.b16 %v1615, %v1611
    %v2396 = vpack.c.b16 %v1616, %v1612
    %v2397 = vpack.c.b16 %v1617, %v1613
    %v2398 = vpack.c.b16 %v1622, %v1618
    %v2399 = vpack.c.b16 %v1623, %v1619
    %v2400 = vpack.c.b16 %v1624, %v1620
    %v2401 = vpack.c.b16 %v1625, %v1621
    %v2402 = vpack.c.b16 %v1630, %v1626
    %v2403 = vpack.c.b16 %v1631, %v1627
    %v2404 = vpack.c.b16 %v1632, %v1628
    %v2405 = vpack.c.b16 %v1633, %v1629
    %v2406 = vpack.c.b16 %v1638, %v1634
    %v2407 = vpack.c.b16 %v1639, %v1635
    %v2408 = vpack.c.b16 %v1640, %v1636
    %v2409 = vpack.c.b16 %v1641, %v1637
    %v2410 = vpack.c.b16 %v1646, %v1642
    %v2411 = vpack.c.b16 %v1647, %v1643
    %v2412 = vpack.c.b16 %v1648, %v1644
    %v2413 = vpack.c.b16 %v1649, %v1645
    %v2414 = vpack.c.b16 %v1654, %v1650
    %v2415 = vpack.c.b16 %v1655, %v1651
    %v2416 = vpack.c.b16 %v1656, %v1652
    %v2417 = vpack.c.b16 %v1657, %v1653
    %v2418 = vpack.c.b16 %v1662, %v1658
    %v2419 = vpack.c.b16 %v1663, %v1659
    %v2420 = vpack.c.b16 %v1664, %v1660
    %v2421 = vpack.c.b16 %v1665, %v1661
    %v2422 = vpack.c.b16 %v1670, %v1666
    %v2423 = vpack.c.b16 %v1671, %v1667
    %v2424 = vpack.c.b16 %v1672, %v1668
    %v2425 = vpack.c.b16 %v1673, %v1669
    %v2426 = vpack.c.b16 %v1678, %v1674
    %v2427 = vpack.c.b16 %v1679, %v1675
    %v2428 = vpack.c.b16 %v1680, %v1676
    %v2429 = vpack.c.b16 %v1681, %v1677
    %v2430 = vpack.c.b16 %v1686, %v1682
    %v2431 = vpack.c.b16 %v1687, %v1683
    %v2432 = vpack.c.b16 %v1688, %v1684
    %v2433 = vpack.c.b16 %v1689, %v1685
    %v2434 = vpack.c.b16 %v1694, %v1690
    %v2435 = vpack.c.b16 %v1695, %v1691
    %v2436 = vpack.c.b16 %v1696, %v1692
    %v2437 = vpack.c.b16 %v1697, %v1693
    %v2438 = vpack.c.b16 %v1702, %v1698
    %v2439 = vpack.c.b16 %v1703, %v1699
    %v2440 = vpack.c.b16 %v1704, %v1700
    %v2441 = vpack.c.b16 %v1705, %v1701
    %v2442 = vpack.c.b16 %v1710, %v1706
    %v2443 = vpack.c.b16 %v1711, %v1707
    %v2444 = vpack.c.b16 %v1712, %v1708
    %v2445 = vpack.c.b16 %v1713, %v1709
    %v2446 = vpack.c.b16 %v1718, %v1714
    %v2447 = vpack.c.b16 %v1719, %v1715
    %v2448 = vpack.c.b16 %v1720, %v1716
    %v2449 = vpack.c.b16 %v1721, %v1717
    %v2450 = vpack.c.b16 %v1726, %v1722
    %v2451 = vpack.c.b16 %v1727, %v1723
    %v2452 = vpack.c.b16 %v1728, %v1724
    %v2453 = vpack.c.b16 %v1729, %v1725
    %v2454 = vpack.c.b16 %v1734, %v1730
    %v2455 = vpack.c.b16 %v1735, %v1731
    %v2456 = vpack.c.b16 %v1736, %v1732
    %v2457 = vpack.c.b16 %v1737, %v1733
    %v2458 = vpack.c.b16 %v1742, %v1738
    %v2459 = vpack.c.b16 %v1743, %v1739
    %v2460 = vpack.c.b16 %v1744, %v1740
    %v2461 = vpack.c.b16 %v1745, %v1741
    %v2462 = vpack.c.b16 %v1750, %v1746
    %v2463 = vpack.c.b16 %v1751, %v1747
    %v2464 = vpack.c.b16 %v1752, %v1748
    %v2465 = vpack.c.b16 %v1753, %v1749
    %v2466 = vpack.c.b16 %v1758, %v1754
    %v2467 = vpack.c.b16 %v1759, %v1755
    %v2468 = vpack.c.b16 %v1760, %v1756
    %v2469 = vpack.c.b16 %v1761, %v1757
    %v2470 = vpack.c.b16 %v1766, %v1762
    %v2471 = vpack.c.b16 %v1767, %v1763
    %v2472 = vpack.c.b16 %v1768, %v1764
    %v2473 = vpack.c.b16 %v1769, %v1765
    %v2474 = vpack.c.b16 %v1774, %v1770
    %v2475 = vpack.c.b16 %v1775, %v1771
    %v2476 = vpack.c.b16 %v1776, %v1772
    %v2477 = vpack.c.b16 %v1777, %v1773
    %v2478 = vpack.c.b16 %v1782, %v1778
    %v2479 = vpack.c.b16 %v1783, %v1779
    %v2480 = vpack.c.b16 %v1784, %v1780
    %v2481 = vpack.c.b16 %v1785, %v1781
    %v2482 = vpack.c.b16 %v1790, %v1786
    %v2483 = vpack.c.b16 %v1791, %v1787
    %v2484 = vpack.c.b16 %v1792, %v1788
    %v2485 = vpack.c.b16 %v1793, %v1789
    %v2486 = vpack.c.b16 %v1798, %v1794
    %v2487 = vpack.c.b16 %v1799, %v1795
    %v2488 = vpack.c.b16 %v1800, %v1796
    %v2489 = vpack.c.b16 %v1801, %v1797
    %v2490 = vpack.c.b16 %v1806, %v1802
    %v2491 = vpack.c.b16 %v1807, %v1803
    %v2492 = vpack.c.b16 %v1808, %v1804
    %v2493 = vpack.c.b16 %v1809, %v1805
    %v2494 = vpack.c.b16 %v1814, %v1810
    %v2495 = vpack.c.b16 %v1815, %v1811
    %v2496 = vpack.c.b16 %v1816, %v1812
    %v2497 = vpack.c.b16 %v1817, %v1813
    %v2498 = vpack.c.b16 %v1822, %v1818
    %v2499 = vpack.c.b16 %v1823, %v1819
    %v2500 = vpack.c.b16 %v1824, %v1820
    %v2501 = vpack.c.b16 %v1825, %v1821
    %v2502 = vpack.c.b16 %v1830, %v1826
    %v2503 = vpack.c.b16 %v1831, %v1827
    %v2504 = vpack.c.b16 %v1832, %v1828
    %v2505 = vpack.c.b16 %v1833, %v1829
    %v2506 = vpack.c.b16 %v1838, %v1834
    %v2507 = vpack.c.b16 %v1839, %v1835
    %v2508 = vpack.c.b16 %v1840, %v1836
    %v2509 = vpack.c.b16 %v1841, %v1837
    %v2510 = vpack.c.b16 %v1846, %v1842
    %v2511 = vpack.c.b16 %v1847, %v1843
    %v2512 = vpack.c.b16 %v1848, %v1844
    %v2513 = vpack.c.b16 %v1849, %v1845
    %v2514 = vpack.c.b16 %v1854, %v1850
    %v2515 = vpack.c.b16 %v1855, %v1851
    %v2516 = vpack.c.b16 %v1856, %v1852
    %v2517 = vpack.c.b16 %v1857, %v1853
    %v2518 = vpack.c.b16 %v1862, %v1858
    %v2519 = vpack.c.b16 %v1863, %v1859
    %v2520 = vpack.c.b16 %v1864, %v1860
    %v2521 = vpack.c.b16 %v1865, %v1861
    %v2522 = vpack.c.b16 %v1870, %v1866
    %v2523 = vpack.c.b16 %v1871, %v1867
    %v2524 = vpack.c.b16 %v1872, %v1868
    %v2525 = vpack.c.b16 %v1873, %v1869
    %v2526 = vpack.c.b16 %v1878, %v1874
    %v2527 = vpack.c.b16 %v1879, %v1875
    %v2528 = vpack.c.b16 %v1880, %v1876
    %v2529 = vpack.c.b16 %v1881, %v1877
    %v2530 = vpack.c.b16 %v1886, %v1882
    %v2531 = vpack.c.b16 %v1887, %v1883
    %v2532 = vpack.c.b16 %v1888, %v1884
    %v2533 = vpack.c.b16 %v1889, %v1885
    %v2534 = vpack.c.b16 %v1894, %v1890
    %v2535 = vpack.c.b16 %v1895, %v1891
    %v2536 = vpack.c.b16 %v1896, %v1892
    %v2537 = vpack.c.b16 %v1897, %v1893
    %v2538 = vpack.c.b16 %v1902, %v1898
    %v2539 = vpack.c.b16 %v1903, %v1899
    %v2540 = vpack.c.b16 %v1904, %v1900
    %v2541 = vpack.c.b16 %v1905, %v1901
    %v2542 = vpack.c.b16 %v1910, %v1906
    %v2543 = vpack.c.b16 %v1911, %v1907
    %v2544 = vpack.c.b16 %v1912, %v1908
    %v2545 = vpack.c.b16 %v1913, %v1909
    %v2546 = vpack.c.b16 %v1918, %v1914
    %v2547 = vpack.c.b16 %v1919, %v1915
    %v2548 = vpack.c.b16 %v1920, %v1916
    %v2549 = vpack.c.b16 %v1921, %v1917
    %v2550 = vpack.c.b16 %v1926, %v1922
    %v2551 = vpack.c.b16 %v1927, %v1923
    %v2552 = vpack.c.b16 %v1928, %v1924
    %v2553 = vpack.c.b16 %v1929, %v1925
    %v2554 = vpack.c.b16 %v1934, %v1930
    %v2555 = vpack.c.b16 %v1935, %v1931
    %v2556 = vpack.c.b16 %v1936, %v1932
    %v2557 = vpack.c.b16 %v1937, %v1933
    %v2558 = vpack.c.b16 %v1942, %v1938
    %v2559 = vpack.c.b16 %v1943, %v1939
    %v2560 = vpack.c.b16 %v1944, %v1940
    %v2561 = vpack.c.b16 %v1945, %v1941
    %v2562 = vpack.c.b16 %v1950, %v1946
    %v2563 = vpack.c.b16 %v1951, %v1947
    %v2564 = vpack.c.b16 %v1952, %v1948
    %v2565 = vpack.c.b16 %v1953, %v1949
    %v2566 = vpack.c.b16 %v1958, %v1954
    %v2567 = vpack.c.b16 %v1959, %v1955
    %v2568 = vpack.c.b16 %v1960, %v1956
    %v2569 = vpack.c.b16 %v1961, %v1957
    %v2570 = vpack.c.b16 %v1966, %v1962
    %v2571 = vpack.c.b16 %v1967, %v1963
    %v2572 = vpack.c.b16 %v1968, %v1964
    %v2573 = vpack.c.b16 %v1969, %v1965
    %v2574 = vpack.c.b16 %v1974, %v1970
    %v2575 = vpack.c.b16 %v1975, %v1971
    %v2576 = vpack.c.b16 %v1976, %v1972
    %v2577 = vpack.c.b16 %v1977, %v1973
    %v2578 = vpack.c.b16 %v1982, %v1978
    %v2579 = vpack.c.b16 %v1983, %v1979
    %v2580 = vpack.c.b16 %v1984, %v1980
    %v2581 = vpack.c.b16 %v1985, %v1981
    %v2582 = vpack.c.b16 %v1990, %v1986
    %v2583 = vpack.c.b16 %v1991, %v1987
    %v2584 = vpack.c.b16 %v1992, %v1988
    %v2585 = vpack.c.b16 %v1993, %v1989
    %v2586 = vpack.c.b16 %v1998, %v1994
    %v2587 = vpack.c.b16 %v1999, %v1995
    %v2588 = vpack.c.b16 %v2000, %v1996
    %v2589 = vpack.c.b16 %v2001, %v1997
    %v2590 = vpack.c.b16 %v2006, %v2002
    %v2591 = vpack.c.b16 %v2007, %v2003
    %v2592 = vpack.c.b16 %v2008, %v2004
    %v2593 = vpack.c.b16 %v2009, %v2005
    %v2594 = vpack.c.b16 %v2014, %v2010
    %v2595 = vpack.c.b16 %v2015, %v2011
    %v2596 = vpack.c.b16 %v2016, %v2012
    %v2597 = vpack.c.b16 %v2017, %v2013
    %v2598 = vpack.c.b16 %v2022, %v2018
    %v2599 = vpack.c.b16 %v2023, %v2019
    %v2600 = vpack.c.b16 %v2024, %v2020
    %v2601 = vpack.c.b16 %v2025, %v2021
    %v2602 = vpack.c.b16 %v2030, %v2026
    %v2603 = vpack.c.b16 %v2031, %v2027
    %v2604 = vpack.c.b16 %v2032, %v2028
    %v2605 = vpack.c.b16 %v2033, %v2029
    %v2606 = vpack.c.b16 %v2038, %v2034
    %v2607 = vpack.c.b16 %v2039, %v2035
    %v2608 = vpack.c.b16 %v2040, %v2036
    %v2609 = vpack.c.b16 %v2041, %v2037
    %v2610 = vpack.c.b16 %v2046, %v2042
    %v2611 = vpack.c.b16 %v2047, %v2043
    %v2612 = vpack.c.b16 %v2048, %v2044
    %v2613 = vpack.c.b16 %v2049, %v2045
    %v2614 = vpack.c.b16 %v2054, %v2050
    %v2615 = vpack.c.b16 %v2055, %v2051
    %v2616 = vpack.c.b16 %v2056, %v2052
    %v2617 = vpack.c.b16 %v2057, %v2053
    %v2618 = vpack.c.b16 %v2062, %v2058
    %v2619 = vpack.c.b16 %v2063, %v2059
    %v2620 = vpack.c.b16 %v2064, %v2060
    %v2621 = vpack.c.b16 %v2065, %v2061
    %v2622 = vpack.c.b16 %v2070, %v2066
    %v2623 = vpack.c.b16 %v2071, %v2067
    %v2624 = vpack.c.b16 %v2072, %v2068
    %v2625 = vpack.c.b16 %v2073, %v2069
    %v2626 = vpack.c.b16 %v2078, %v2074
    %v2627 = vpack.c.b16 %v2079, %v2075
    %v2628 = vpack.c.b16 %v2080, %v2076
    %v2629 = vpack.c.b16 %v2081, %v2077
    %v2630 = vpack.c.b16 %v2086, %v2082
    %v2631 = vpack.c.b16 %v2087, %v2083
    %v2632 = vpack.c.b16 %v2088, %v2084
    %v2633 = vpack.c.b16 %v2089, %v2085
    %v2634 = vpack.c.b16 %v2094, %v2090
    %v2635 = vpack.c.b16 %v2095, %v2091
    %v2636 = vpack.c.b16 %v2096, %v2092
    %v2637 = vpack.c.b16 %v2097, %v2093
    %v2638 = vpack.c.b16 %v2102, %v2098
    %v2639 = vpack.c.b16 %v2103, %v2099
    %v2640 = vpack.c.b16 %v2104, %v2100
    %v2641 = vpack.c.b16 %v2105, %v2101
    %v2642 = vpack.c.b16 %v2110, %v2106
    %v2643 = vpack.c.b16 %v2111, %v2107
    %v2644 = vpack.c.b16 %v2112, %v2108
    %v2645 = vpack.c.b16 %v2113, %v2109
    %v2646 = vpack.c.b16 %v2118, %v2114
    %v2647 = vpack.c.b16 %v2119, %v2115
    %v2648 = vpack.c.b16 %v2120, %v2116
    %v2649 = vpack.c.b16 %v2121, %v2117
    %v2650 = vpack.c.b16 %v2126, %v2122
    %v2651 = vpack.c.b16 %v2127, %v2123
    %v2652 = vpack.c.b16 %v2128, %v2124
    %v2653 = vpack.c.b16 %v2129, %v2125
    %v2654 = vpack.c.b16 %v2134, %v2130
    %v2655 = vpack.c.b16 %v2135, %v2131
    %v2656 = vpack.c.b16 %v2136, %v2132
    %v2657 = vpack.c.b16 %v2137, %v2133
    %v2658 = vpack.c.b16 %v2142, %v2138
    %v2659 = vpack.c.b16 %v2143, %v2139
    %v2660 = vpack.c.b16 %v2144, %v2140
    %v2661 = vpack.c.b16 %v2145, %v2141
    %v2662 = vpack.c.b16 %v2150, %v2146
    %v2663 = vpack.c.b16 %v2151, %v2147
    %v2664 = vpack.c.b16 %v2152, %v2148
    %v2665 = vpack.c.b16 %v2153, %v2149
    %3178 = vmatprep.subr.bf16.mxu0 %v2183
    %3179 = vmatpush1.bf16.msra.mxu0 %v2182
    %3180 = vmatprep.subr.bf16.mxu0 %v2179
    %3181 = vmatpush1.bf16.msra.mxu0 %v2178
    %3182 = vmatprep.subr.bf16.mxu0 %v2175
    %3183 = vmatpush1.bf16.msra.mxu0 %v2174
    %3184 = vmatprep.subr.bf16.mxu0 %v2171
    %3185 = vmatpush1.bf16.msra.mxu0 %v2170
    %3186 = vmatprep.subr.bf16.mxu0 %v2167
    %3187 = vmatpush1.bf16.msra.mxu0 %v2166
    %3188 = vmatprep.subr.bf16.mxu0 %v2163
    %3189 = vmatpush1.bf16.msra.mxu0 %v2162
    %3190 = vmatprep.subr.bf16.mxu0 %v2159
    %3191 = vmatpush1.bf16.msra.mxu0 %v2158
    %3192 = vmatprep.subr.bf16.mxu0 %v2155
    %3193 = vmatpush1.bf16.msra.mxu0 %v2154
    %3194 = vmatprep.subr.bf16.mxu0 %v2215
    %3195 = vmatpush2.bf16.msra.mxu0 %v2214
    %3196 = vmatprep.subr.bf16.mxu0 %v2211
    %3197 = vmatpush2.bf16.msra.mxu0 %v2210
    %3198 = vmatprep.subr.bf16.mxu0 %v2207
    %3199 = vmatpush2.bf16.msra.mxu0 %v2206
    %3200 = vmatprep.subr.bf16.mxu0 %v2203
    %3201 = vmatpush2.bf16.msra.mxu0 %v2202
    %3202 = vmatprep.subr.bf16.mxu0 %v2199
    %3203 = vmatpush2.bf16.msra.mxu0 %v2198
    %3204 = vmatprep.subr.bf16.mxu0 %v2195
    %3205 = vmatpush2.bf16.msra.mxu0 %v2194
    %3206 = vmatprep.subr.bf16.mxu0 %v2191
    %3207 = vmatpush2.bf16.msra.mxu0 %v2190
    %3208 = vmatprep.subr.bf16.mxu0 %v2187
    %3209 = vmatpush2.bf16.msra.mxu0 %v2186
    %3210 = vmatprep.mubr.bf16.mxu0 %v69
    %3211 = vmatmul.mubr.bf16.gmra.mxu0 %v68
    %v3212 = vpop.f32.mrf.mxu0
    %v3213 = vadd.f32 %v601, %v3212
    %v3214 = vpop.f32.mrf.mxu0
    %v3215 = vadd.f32 %v605, %v3214
    %v3216 = vpop.f32.mrf.mxu0
    %v3217 = vpop.f32.mrf.mxu0
    %3218 = vdwg.mxu0
    %3219 = vmatprep.subr.bf16.mxu0 %v2247
    %3220 = vmatpush1.bf16.msra.mxu0 %v2246
    %3221 = vmatprep.subr.bf16.mxu0 %v2243
    %3222 = vmatpush1.bf16.msra.mxu0 %v2242
    %3223 = vmatprep.subr.bf16.mxu0 %v2239
    %3224 = vmatpush1.bf16.msra.mxu0 %v2238
    %3225 = vmatprep.subr.bf16.mxu0 %v2235
    %3226 = vmatpush1.bf16.msra.mxu0 %v2234
    %3227 = vmatprep.subr.bf16.mxu0 %v2231
    %3228 = vmatpush1.bf16.msra.mxu0 %v2230
    %3229 = vmatprep.subr.bf16.mxu0 %v2227
    %3230 = vmatpush1.bf16.msra.mxu0 %v2226
    %3231 = vmatprep.subr.bf16.mxu0 %v2223
    %3232 = vmatpush1.bf16.msra.mxu0 %v2222
    %3233 = vmatprep.subr.bf16.mxu0 %v2219
    %3234 = vmatpush1.bf16.msra.mxu0 %v2218
    %3235 = vmatprep.subr.bf16.mxu0 %v2279
    %3236 = vmatpush2.bf16.msra.mxu0 %v2278
    %3237 = vmatprep.subr.bf16.mxu0 %v2275
    %3238 = vmatpush2.bf16.msra.mxu0 %v2274
    %3239 = vmatprep.subr.bf16.mxu0 %v2271
    %3240 = vmatpush2.bf16.msra.mxu0 %v2270
    %3241 = vmatprep.subr.bf16.mxu0 %v2267
    %3242 = vmatpush2.bf16.msra.mxu0 %v2266
    %3243 = vmatprep.subr.bf16.mxu0 %v2263
    %3244 = vmatpush2.bf16.msra.mxu0 %v2262
    %3245 = vmatprep.subr.bf16.mxu0 %v2259
    %3246 = vmatpush2.bf16.msra.mxu0 %v2258
    %3247 = vmatprep.subr.bf16.mxu0 %v2255
    %3248 = vmatpush2.bf16.msra.mxu0 %v2254
    %3249 = vmatprep.subr.bf16.mxu0 %v2251
    %3250 = vmatpush2.bf16.msra.mxu0 %v2250
    %3251 = vmatprep.mubr.bf16.mxu0 %v71
    %3252 = vmatmul.mubr.bf16.gmra.mxu0 %v70
    %v3253 = vpop.f32.mrf.mxu0
    %v3254 = vadd.f32 %v3213, %v3253
    %v3255 = vpop.f32.mrf.mxu0
    %v3256 = vadd.f32 %v3215, %v3255
    %v3257 = vpop.f32.mrf.mxu0
    %v3258 = vpop.f32.mrf.mxu0
    %3259 = vdwg.mxu0
    %3260 = vmatprep.subr.bf16.mxu0 %v2311
    %3261 = vmatpush1.bf16.msra.mxu0 %v2310
    %3262 = vmatprep.subr.bf16.mxu0 %v2307
    %3263 = vmatpush1.bf16.msra.mxu0 %v2306
    %3264 = vmatprep.subr.bf16.mxu0 %v2303
    %3265 = vmatpush1.bf16.msra.mxu0 %v2302
    %3266 = vmatprep.subr.bf16.mxu0 %v2299
    %3267 = vmatpush1.bf16.msra.mxu0 %v2298
    %3268 = vmatprep.subr.bf16.mxu0 %v2295
    %3269 = vmatpush1.bf16.msra.mxu0 %v2294
    %3270 = vmatprep.subr.bf16.mxu0 %v2291
    %3271 = vmatpush1.bf16.msra.mxu0 %v2290
    %3272 = vmatprep.subr.bf16.mxu0 %v2287
    %3273 = vmatpush1.bf16.msra.mxu0 %v2286
    %3274 = vmatprep.subr.bf16.mxu0 %v2283
    %3275 = vmatpush1.bf16.msra.mxu0 %v2282
    %3276 = vmatprep.subr.bf16.mxu0 %v2343
    %3277 = vmatpush2.bf16.msra.mxu0 %v2342
    %3278 = vmatprep.subr.bf16.mxu0 %v2339
    %3279 = vmatpush2.bf16.msra.mxu0 %v2338
    %3280 = vmatprep.subr.bf16.mxu0 %v2335
    %3281 = vmatpush2.bf16.msra.mxu0 %v2334
    %3282 = vmatprep.subr.bf16.mxu0 %v2331
    %3283 = vmatpush2.bf16.msra.mxu0 %v2330
    %3284 = vmatprep.subr.bf16.mxu0 %v2327
    %3285 = vmatpush2.bf16.msra.mxu0 %v2326
    %3286 = vmatprep.subr.bf16.mxu0 %v2323
    %3287 = vmatpush2.bf16.msra.mxu0 %v2322
    %3288 = vmatprep.subr.bf16.mxu0 %v2319
    %3289 = vmatpush2.bf16.msra.mxu0 %v2318
    %3290 = vmatprep.subr.bf16.mxu0 %v2315
    %3291 = vmatpush2.bf16.msra.mxu0 %v2314
    %3292 = vmatprep.mubr.bf16.mxu0 %v73
    %3293 = vmatmul.mubr.bf16.gmra.mxu0 %v72
    %v3294 = vpop.f32.mrf.mxu0
    %v3295 = vadd.f32 %v3254, %v3294
    %v3296 = vpop.f32.mrf.mxu0
    %v3297 = vadd.f32 %v3256, %v3296
    %v3298 = vpop.f32.mrf.mxu0
    %v3299 = vpop.f32.mrf.mxu0
    %3300 = vdwg.mxu0
    %3301 = vmatprep.subr.bf16.mxu0 %v2375
    %3302 = vmatpush1.bf16.msra.mxu0 %v2374
    %3303 = vmatprep.subr.bf16.mxu0 %v2371
    %3304 = vmatpush1.bf16.msra.mxu0 %v2370
    %3305 = vmatprep.subr.bf16.mxu0 %v2367
    %3306 = vmatpush1.bf16.msra.mxu0 %v2366
    %3307 = vmatprep.subr.bf16.mxu0 %v2363
    %3308 = vmatpush1.bf16.msra.mxu0 %v2362
    %3309 = vmatprep.subr.bf16.mxu0 %v2359
    %3310 = vmatpush1.bf16.msra.mxu0 %v2358
    %3311 = vmatprep.subr.bf16.mxu0 %v2355
    %3312 = vmatpush1.bf16.msra.mxu0 %v2354
    %3313 = vmatprep.subr.bf16.mxu0 %v2351
    %3314 = vmatpush1.bf16.msra.mxu0 %v2350
    %3315 = vmatprep.subr.bf16.mxu0 %v2347
    %3316 = vmatpush1.bf16.msra.mxu0 %v2346
    %3317 = vmatprep.subr.bf16.mxu0 %v2407
    %3318 = vmatpush2.bf16.msra.mxu0 %v2406
    %3319 = vmatprep.subr.bf16.mxu0 %v2403
    %3320 = vmatpush2.bf16.msra.mxu0 %v2402
    %3321 = vmatprep.subr.bf16.mxu0 %v2399
    %3322 = vmatpush2.bf16.msra.mxu0 %v2398
    %3323 = vmatprep.subr.bf16.mxu0 %v2395
    %3324 = vmatpush2.bf16.msra.mxu0 %v2394
    %3325 = vmatprep.subr.bf16.mxu0 %v2391
    %3326 = vmatpush2.bf16.msra.mxu0 %v2390
    %3327 = vmatprep.subr.bf16.mxu0 %v2387
    %3328 = vmatpush2.bf16.msra.mxu0 %v2386
    %3329 = vmatprep.subr.bf16.mxu0 %v2383
    %3330 = vmatpush2.bf16.msra.mxu0 %v2382
    %3331 = vmatprep.subr.bf16.mxu0 %v2379
    %3332 = vmatpush2.bf16.msra.mxu0 %v2378
    %3333 = vmatprep.mubr.bf16.mxu0 %v75
    %3334 = vmatmul.mubr.bf16.gmra.mxu0 %v74
    %v3335 = vpop.f32.mrf.mxu0
    %v3336 = vadd.f32 %v3295, %v3335
    %v3337 = vpop.f32.mrf.mxu0
    %v3338 = vadd.f32 %v3297, %v3337
    %v3339 = vpop.f32.mrf.mxu0
    %v3340 = vpop.f32.mrf.mxu0
    %3341 = vdwg.mxu0
    %3342 = vmatprep.subr.bf16.mxu0 %v2439
    %3343 = vmatpush1.bf16.msra.mxu0 %v2438
    %3344 = vmatprep.subr.bf16.mxu0 %v2435
    %3345 = vmatpush1.bf16.msra.mxu0 %v2434
    %3346 = vmatprep.subr.bf16.mxu0 %v2431
    %3347 = vmatpush1.bf16.msra.mxu0 %v2430
    %3348 = vmatprep.subr.bf16.mxu0 %v2427
    %3349 = vmatpush1.bf16.msra.mxu0 %v2426
    %3350 = vmatprep.subr.bf16.mxu0 %v2423
    %3351 = vmatpush1.bf16.msra.mxu0 %v2422
    %3352 = vmatprep.subr.bf16.mxu0 %v2419
    %3353 = vmatpush1.bf16.msra.mxu0 %v2418
    %3354 = vmatprep.subr.bf16.mxu0 %v2415
    %3355 = vmatpush1.bf16.msra.mxu0 %v2414
    %3356 = vmatprep.subr.bf16.mxu0 %v2411
    %3357 = vmatpush1.bf16.msra.mxu0 %v2410
    %3358 = vmatprep.subr.bf16.mxu0 %v2471
    %3359 = vmatpush2.bf16.msra.mxu0 %v2470
    %3360 = vmatprep.subr.bf16.mxu0 %v2467
    %3361 = vmatpush2.bf16.msra.mxu0 %v2466
    %3362 = vmatprep.subr.bf16.mxu0 %v2463
    %3363 = vmatpush2.bf16.msra.mxu0 %v2462
    %3364 = vmatprep.subr.bf16.mxu0 %v2459
    %3365 = vmatpush2.bf16.msra.mxu0 %v2458
    %3366 = vmatprep.subr.bf16.mxu0 %v2455
    %3367 = vmatpush2.bf16.msra.mxu0 %v2454
    %3368 = vmatprep.subr.bf16.mxu0 %v2451
    %3369 = vmatpush2.bf16.msra.mxu0 %v2450
    %3370 = vmatprep.subr.bf16.mxu0 %v2447
    %3371 = vmatpush2.bf16.msra.mxu0 %v2446
    %3372 = vmatprep.subr.bf16.mxu0 %v2443
    %3373 = vmatpush2.bf16.msra.mxu0 %v2442
    %3374 = vmatprep.mubr.bf16.mxu0 %v77
    %3375 = vmatmul.mubr.bf16.gmra.mxu0 %v76
    %v3376 = vpop.f32.mrf.mxu0
    %v3377 = vadd.f32 %v3336, %v3376
    %v3378 = vpop.f32.mrf.mxu0
    %v3379 = vadd.f32 %v3338, %v3378
    %v3380 = vpop.f32.mrf.mxu0
    %v3381 = vpop.f32.mrf.mxu0
    %3382 = vdwg.mxu0
    %3383 = vmatprep.subr.bf16.mxu0 %v2503
    %3384 = vmatpush1.bf16.msra.mxu0 %v2502
    %3385 = vmatprep.subr.bf16.mxu0 %v2499
    %3386 = vmatpush1.bf16.msra.mxu0 %v2498
    %3387 = vmatprep.subr.bf16.mxu0 %v2495
    %3388 = vmatpush1.bf16.msra.mxu0 %v2494
    %3389 = vmatprep.subr.bf16.mxu0 %v2491
    %3390 = vmatpush1.bf16.msra.mxu0 %v2490
    %3391 = vmatprep.subr.bf16.mxu0 %v2487
    %3392 = vmatpush1.bf16.msra.mxu0 %v2486
    %3393 = vmatprep.subr.bf16.mxu0 %v2483
    %3394 = vmatpush1.bf16.msra.mxu0 %v2482
    %3395 = vmatprep.subr.bf16.mxu0 %v2479
    %3396 = vmatpush1.bf16.msra.mxu0 %v2478
    %3397 = vmatprep.subr.bf16.mxu0 %v2475
    %3398 = vmatpush1.bf16.msra.mxu0 %v2474
    %3399 = vmatprep.subr.bf16.mxu0 %v2535
    %3400 = vmatpush2.bf16.msra.mxu0 %v2534
    %3401 = vmatprep.subr.bf16.mxu0 %v2531
    %3402 = vmatpush2.bf16.msra.mxu0 %v2530
    %3403 = vmatprep.subr.bf16.mxu0 %v2527
    %3404 = vmatpush2.bf16.msra.mxu0 %v2526
    %3405 = vmatprep.subr.bf16.mxu0 %v2523
    %3406 = vmatpush2.bf16.msra.mxu0 %v2522
    %3407 = vmatprep.subr.bf16.mxu0 %v2519
    %3408 = vmatpush2.bf16.msra.mxu0 %v2518
    %3409 = vmatprep.subr.bf16.mxu0 %v2515
    %3410 = vmatpush2.bf16.msra.mxu0 %v2514
    %3411 = vmatprep.subr.bf16.mxu0 %v2511
    %3412 = vmatpush2.bf16.msra.mxu0 %v2510
    %3413 = vmatprep.subr.bf16.mxu0 %v2507
    %3414 = vmatpush2.bf16.msra.mxu0 %v2506
    %3415 = vmatprep.mubr.bf16.mxu0 %v79
    %3416 = vmatmul.mubr.bf16.gmra.mxu0 %v78
    %v3417 = vpop.f32.mrf.mxu0
    %v3418 = vadd.f32 %v3377, %v3417
    %v3419 = vpop.f32.mrf.mxu0
    %v3420 = vadd.f32 %v3379, %v3419
    %v3421 = vpop.f32.mrf.mxu0
    %v3422 = vpop.f32.mrf.mxu0
    %3423 = vdwg.mxu0
    %3424 = vmatprep.subr.bf16.mxu0 %v2567
    %3425 = vmatpush1.bf16.msra.mxu0 %v2566
    %3426 = vmatprep.subr.bf16.mxu0 %v2563
    %3427 = vmatpush1.bf16.msra.mxu0 %v2562
    %3428 = vmatprep.subr.bf16.mxu0 %v2559
    %3429 = vmatpush1.bf16.msra.mxu0 %v2558
    %3430 = vmatprep.subr.bf16.mxu0 %v2555
    %3431 = vmatpush1.bf16.msra.mxu0 %v2554
    %3432 = vmatprep.subr.bf16.mxu0 %v2551
    %3433 = vmatpush1.bf16.msra.mxu0 %v2550
    %3434 = vmatprep.subr.bf16.mxu0 %v2547
    %3435 = vmatpush1.bf16.msra.mxu0 %v2546
    %3436 = vmatprep.subr.bf16.mxu0 %v2543
    %3437 = vmatpush1.bf16.msra.mxu0 %v2542
    %3438 = vmatprep.subr.bf16.mxu0 %v2539
    %3439 = vmatpush1.bf16.msra.mxu0 %v2538
    %3440 = vmatprep.subr.bf16.mxu0 %v2599
    %3441 = vmatpush2.bf16.msra.mxu0 %v2598
    %3442 = vmatprep.subr.bf16.mxu0 %v2595
    %3443 = vmatpush2.bf16.msra.mxu0 %v2594
    %3444 = vmatprep.subr.bf16.mxu0 %v2591
    %3445 = vmatpush2.bf16.msra.mxu0 %v2590
    %3446 = vmatprep.subr.bf16.mxu0 %v2587
    %3447 = vmatpush2.bf16.msra.mxu0 %v2586
    %3448 = vmatprep.subr.bf16.mxu0 %v2583
    %3449 = vmatpush2.bf16.msra.mxu0 %v2582
    %3450 = vmatprep.subr.bf16.mxu0 %v2579
    %3451 = vmatpush2.bf16.msra.mxu0 %v2578
    %3452 = vmatprep.subr.bf16.mxu0 %v2575
    %3453 = vmatpush2.bf16.msra.mxu0 %v2574
    %3454 = vmatprep.subr.bf16.mxu0 %v2571
    %3455 = vmatpush2.bf16.msra.mxu0 %v2570
    %3456 = vmatprep.mubr.bf16.mxu0 %v81
    %3457 = vmatmul.mubr.bf16.gmra.mxu0 %v80
    %v3458 = vpop.f32.mrf.mxu0
    %v3459 = vadd.f32 %v3418, %v3458
    %v3460 = vpop.f32.mrf.mxu0
    %v3461 = vadd.f32 %v3420, %v3460
    %v3462 = vpop.f32.mrf.mxu0
    %v3463 = vpop.f32.mrf.mxu0
    %3464 = vdwg.mxu0
    %3465 = vmatprep.subr.bf16.mxu0 %v2631
    %3466 = vmatpush1.bf16.msra.mxu0 %v2630
    %3467 = vmatprep.subr.bf16.mxu0 %v2627
    %3468 = vmatpush1.bf16.msra.mxu0 %v2626
    %3469 = vmatprep.subr.bf16.mxu0 %v2623
    %3470 = vmatpush1.bf16.msra.mxu0 %v2622
    %3471 = vmatprep.subr.bf16.mxu0 %v2619
    %3472 = vmatpush1.bf16.msra.mxu0 %v2618
    %3473 = vmatprep.subr.bf16.mxu0 %v2615
    %3474 = vmatpush1.bf16.msra.mxu0 %v2614
    %3475 = vmatprep.subr.bf16.mxu0 %v2611
    %3476 = vmatpush1.bf16.msra.mxu0 %v2610
    %3477 = vmatprep.subr.bf16.mxu0 %v2607
    %3478 = vmatpush1.bf16.msra.mxu0 %v2606
    %3479 = vmatprep.subr.bf16.mxu0 %v2603
    %3480 = vmatpush1.bf16.msra.mxu0 %v2602
    %3481 = vmatprep.subr.bf16.mxu0 %v2663
    %3482 = vmatpush2.bf16.msra.mxu0 %v2662
    %3483 = vmatprep.subr.bf16.mxu0 %v2659
    %3484 = vmatpush2.bf16.msra.mxu0 %v2658
    %3485 = vmatprep.subr.bf16.mxu0 %v2655
    %3486 = vmatpush2.bf16.msra.mxu0 %v2654
    %3487 = vmatprep.subr.bf16.mxu0 %v2651
    %3488 = vmatpush2.bf16.msra.mxu0 %v2650
    %3489 = vmatprep.subr.bf16.mxu0 %v2647
    %3490 = vmatpush2.bf16.msra.mxu0 %v2646
    %3491 = vmatprep.subr.bf16.mxu0 %v2643
    %3492 = vmatpush2.bf16.msra.mxu0 %v2642
    %3493 = vmatprep.subr.bf16.mxu0 %v2639
    %3494 = vmatpush2.bf16.msra.mxu0 %v2638
    %3495 = vmatprep.subr.bf16.mxu0 %v2635
    %3496 = vmatpush2.bf16.msra.mxu0 %v2634
    %3497 = vmatprep.mubr.bf16.mxu0 %v83
    %3498 = vmatmul.mubr.bf16.gmra.mxu0 %v82
    %v3499 = vpop.f32.mrf.mxu0
    %v3500 = vadd.f32 %v3459, %v3499
    %v3501 = vpop.f32.mrf.mxu0
    %v3502 = vadd.f32 %v3461, %v3501
    %v3503 = vpop.f32.mrf.mxu0
    %v3504 = vpop.f32.mrf.mxu0
    %3505 = vdwg.mxu0
    %3506 = vmatprep.subr.bf16.mxu0 %v2185
    %3507 = vmatpush1.bf16.msra.mxu0 %v2184
    %3508 = vmatprep.subr.bf16.mxu0 %v2181
    %3509 = vmatpush1.bf16.msra.mxu0 %v2180
    %3510 = vmatprep.subr.bf16.mxu0 %v2177
    %3511 = vmatpush1.bf16.msra.mxu0 %v2176
    %3512 = vmatprep.subr.bf16.mxu0 %v2173
    %3513 = vmatpush1.bf16.msra.mxu0 %v2172
    %3514 = vmatprep.subr.bf16.mxu0 %v2169
    %3515 = vmatpush1.bf16.msra.mxu0 %v2168
    %3516 = vmatprep.subr.bf16.mxu0 %v2165
    %3517 = vmatpush1.bf16.msra.mxu0 %v2164
    %3518 = vmatprep.subr.bf16.mxu0 %v2161
    %3519 = vmatpush1.bf16.msra.mxu0 %v2160
    %3520 = vmatprep.subr.bf16.mxu0 %v2157
    %3521 = vmatpush1.bf16.msra.mxu0 %v2156
    %3522 = vmatprep.subr.bf16.mxu0 %v2217
    %3523 = vmatpush2.bf16.msra.mxu0 %v2216
    %3524 = vmatprep.subr.bf16.mxu0 %v2213
    %3525 = vmatpush2.bf16.msra.mxu0 %v2212
    %3526 = vmatprep.subr.bf16.mxu0 %v2209
    %3527 = vmatpush2.bf16.msra.mxu0 %v2208
    %3528 = vmatprep.subr.bf16.mxu0 %v2205
    %3529 = vmatpush2.bf16.msra.mxu0 %v2204
    %3530 = vmatprep.subr.bf16.mxu0 %v2201
    %3531 = vmatpush2.bf16.msra.mxu0 %v2200
    %3532 = vmatprep.subr.bf16.mxu0 %v2197
    %3533 = vmatpush2.bf16.msra.mxu0 %v2196
    %3534 = vmatprep.subr.bf16.mxu0 %v2193
    %3535 = vmatpush2.bf16.msra.mxu0 %v2192
    %3536 = vmatprep.subr.bf16.mxu0 %v2189
    %3537 = vmatpush2.bf16.msra.mxu0 %v2188
    %3538 = vmatprep.mubr.bf16.mxu0 %v69
    %3539 = vmatmul.mubr.bf16.gmra.mxu0 %v68
    %v3540 = vpop.f32.mrf.mxu0
    %v3541 = vadd.f32 %v609, %v3540
    %v3542 = vpop.f32.mrf.mxu0
    %v3543 = vadd.f32 %v613, %v3542
    %v3544 = vpop.f32.mrf.mxu0
    %v3545 = vpop.f32.mrf.mxu0
    %3546 = vdwg.mxu0
    %3547 = vmatprep.subr.bf16.mxu0 %v2249
    %3548 = vmatpush1.bf16.msra.mxu0 %v2248
    %3549 = vmatprep.subr.bf16.mxu0 %v2245
    %3550 = vmatpush1.bf16.msra.mxu0 %v2244
    %3551 = vmatprep.subr.bf16.mxu0 %v2241
    %3552 = vmatpush1.bf16.msra.mxu0 %v2240
    %3553 = vmatprep.subr.bf16.mxu0 %v2237
    %3554 = vmatpush1.bf16.msra.mxu0 %v2236
    %3555 = vmatprep.subr.bf16.mxu0 %v2233
    %3556 = vmatpush1.bf16.msra.mxu0 %v2232
    %3557 = vmatprep.subr.bf16.mxu0 %v2229
    %3558 = vmatpush1.bf16.msra.mxu0 %v2228
    %3559 = vmatprep.subr.bf16.mxu0 %v2225
    %3560 = vmatpush1.bf16.msra.mxu0 %v2224
    %3561 = vmatprep.subr.bf16.mxu0 %v2221
    %3562 = vmatpush1.bf16.msra.mxu0 %v2220
    %3563 = vmatprep.subr.bf16.mxu0 %v2281
    %3564 = vmatpush2.bf16.msra.mxu0 %v2280
    %3565 = vmatprep.subr.bf16.mxu0 %v2277
    %3566 = vmatpush2.bf16.msra.mxu0 %v2276
    %3567 = vmatprep.subr.bf16.mxu0 %v2273
    %3568 = vmatpush2.bf16.msra.mxu0 %v2272
    %3569 = vmatprep.subr.bf16.mxu0 %v2269
    %3570 = vmatpush2.bf16.msra.mxu0 %v2268
    %3571 = vmatprep.subr.bf16.mxu0 %v2265
    %3572 = vmatpush2.bf16.msra.mxu0 %v2264
    %3573 = vmatprep.subr.bf16.mxu0 %v2261
    %3574 = vmatpush2.bf16.msra.mxu0 %v2260
    %3575 = vmatprep.subr.bf16.mxu0 %v2257
    %3576 = vmatpush2.bf16.msra.mxu0 %v2256
    %3577 = vmatprep.subr.bf16.mxu0 %v2253
    %3578 = vmatpush2.bf16.msra.mxu0 %v2252
    %3579 = vmatprep.mubr.bf16.mxu0 %v71
    %3580 = vmatmul.mubr.bf16.gmra.mxu0 %v70
    %v3581 = vpop.f32.mrf.mxu0
    %v3582 = vadd.f32 %v3541, %v3581
    %v3583 = vpop.f32.mrf.mxu0
    %v3584 = vadd.f32 %v3543, %v3583
    %v3585 = vpop.f32.mrf.mxu0
    %v3586 = vpop.f32.mrf.mxu0
    %3587 = vdwg.mxu0
    %3588 = vmatprep.subr.bf16.mxu0 %v2313
    %3589 = vmatpush1.bf16.msra.mxu0 %v2312
    %3590 = vmatprep.subr.bf16.mxu0 %v2309
    %3591 = vmatpush1.bf16.msra.mxu0 %v2308
    %3592 = vmatprep.subr.bf16.mxu0 %v2305
    %3593 = vmatpush1.bf16.msra.mxu0 %v2304
    %3594 = vmatprep.subr.bf16.mxu0 %v2301
    %3595 = vmatpush1.bf16.msra.mxu0 %v2300
    %3596 = vmatprep.subr.bf16.mxu0 %v2297
    %3597 = vmatpush1.bf16.msra.mxu0 %v2296
    %3598 = vmatprep.subr.bf16.mxu0 %v2293
    %3599 = vmatpush1.bf16.msra.mxu0 %v2292
    %3600 = vmatprep.subr.bf16.mxu0 %v2289
    %3601 = vmatpush1.bf16.msra.mxu0 %v2288
    %3602 = vmatprep.subr.bf16.mxu0 %v2285
    %3603 = vmatpush1.bf16.msra.mxu0 %v2284
    %3604 = vmatprep.subr.bf16.mxu0 %v2345
    %3605 = vmatpush2.bf16.msra.mxu0 %v2344
    %3606 = vmatprep.subr.bf16.mxu0 %v2341
    %3607 = vmatpush2.bf16.msra.mxu0 %v2340
    %3608 = vmatprep.subr.bf16.mxu0 %v2337
    %3609 = vmatpush2.bf16.msra.mxu0 %v2336
    %3610 = vmatprep.subr.bf16.mxu0 %v2333
    %3611 = vmatpush2.bf16.msra.mxu0 %v2332
    %3612 = vmatprep.subr.bf16.mxu0 %v2329
    %3613 = vmatpush2.bf16.msra.mxu0 %v2328
    %3614 = vmatprep.subr.bf16.mxu0 %v2325
    %3615 = vmatpush2.bf16.msra.mxu0 %v2324
    %3616 = vmatprep.subr.bf16.mxu0 %v2321
    %3617 = vmatpush2.bf16.msra.mxu0 %v2320
    %3618 = vmatprep.subr.bf16.mxu0 %v2317
    %3619 = vmatpush2.bf16.msra.mxu0 %v2316
    %3620 = vmatprep.mubr.bf16.mxu0 %v73
    %3621 = vmatmul.mubr.bf16.gmra.mxu0 %v72
    %v3622 = vpop.f32.mrf.mxu0
    %v3623 = vadd.f32 %v3582, %v3622
    %v3624 = vpop.f32.mrf.mxu0
    %v3625 = vadd.f32 %v3584, %v3624
    %v3626 = vpop.f32.mrf.mxu0
    %v3627 = vpop.f32.mrf.mxu0
    %3628 = vdwg.mxu0
    %3629 = vmatprep.subr.bf16.mxu0 %v2377
    %3630 = vmatpush1.bf16.msra.mxu0 %v2376
    %3631 = vmatprep.subr.bf16.mxu0 %v2373
    %3632 = vmatpush1.bf16.msra.mxu0 %v2372
    %3633 = vmatprep.subr.bf16.mxu0 %v2369
    %3634 = vmatpush1.bf16.msra.mxu0 %v2368
    %3635 = vmatprep.subr.bf16.mxu0 %v2365
    %3636 = vmatpush1.bf16.msra.mxu0 %v2364
    %3637 = vmatprep.subr.bf16.mxu0 %v2361
    %3638 = vmatpush1.bf16.msra.mxu0 %v2360
    %3639 = vmatprep.subr.bf16.mxu0 %v2357
    %3640 = vmatpush1.bf16.msra.mxu0 %v2356
    %3641 = vmatprep.subr.bf16.mxu0 %v2353
    %3642 = vmatpush1.bf16.msra.mxu0 %v2352
    %3643 = vmatprep.subr.bf16.mxu0 %v2349
    %3644 = vmatpush1.bf16.msra.mxu0 %v2348
    %3645 = vmatprep.subr.bf16.mxu0 %v2409
    %3646 = vmatpush2.bf16.msra.mxu0 %v2408
    %3647 = vmatprep.subr.bf16.mxu0 %v2405
    %3648 = vmatpush2.bf16.msra.mxu0 %v2404
    %3649 = vmatprep.subr.bf16.mxu0 %v2401
    %3650 = vmatpush2.bf16.msra.mxu0 %v2400
    %3651 = vmatprep.subr.bf16.mxu0 %v2397
    %3652 = vmatpush2.bf16.msra.mxu0 %v2396
    %3653 = vmatprep.subr.bf16.mxu0 %v2393
    %3654 = vmatpush2.bf16.msra.mxu0 %v2392
    %3655 = vmatprep.subr.bf16.mxu0 %v2389
    %3656 = vmatpush2.bf16.msra.mxu0 %v2388
    %3657 = vmatprep.subr.bf16.mxu0 %v2385
    %3658 = vmatpush2.bf16.msra.mxu0 %v2384
    %3659 = vmatprep.subr.bf16.mxu0 %v2381
    %3660 = vmatpush2.bf16.msra.mxu0 %v2380
    %3661 = vmatprep.mubr.bf16.mxu0 %v75
    %3662 = vmatmul.mubr.bf16.gmra.mxu0 %v74
    %v3663 = vpop.f32.mrf.mxu0
    %v3664 = vadd.f32 %v3623, %v3663
    %v3665 = vpop.f32.mrf.mxu0
    %v3666 = vadd.f32 %v3625, %v3665
    %v3667 = vpop.f32.mrf.mxu0
    %v3668 = vpop.f32.mrf.mxu0
    %3669 = vdwg.mxu0
    %3670 = vmatprep.subr.bf16.mxu0 %v2441
    %3671 = vmatpush1.bf16.msra.mxu0 %v2440
    %3672 = vmatprep.subr.bf16.mxu0 %v2437
    %3673 = vmatpush1.bf16.msra.mxu0 %v2436
    %3674 = vmatprep.subr.bf16.mxu0 %v2433
    %3675 = vmatpush1.bf16.msra.mxu0 %v2432
    %3676 = vmatprep.subr.bf16.mxu0 %v2429
    %3677 = vmatpush1.bf16.msra.mxu0 %v2428
    %3678 = vmatprep.subr.bf16.mxu0 %v2425
    %3679 = vmatpush1.bf16.msra.mxu0 %v2424
    %3680 = vmatprep.subr.bf16.mxu0 %v2421
    %3681 = vmatpush1.bf16.msra.mxu0 %v2420
    %3682 = vmatprep.subr.bf16.mxu0 %v2417
    %3683 = vmatpush1.bf16.msra.mxu0 %v2416
    %3684 = vmatprep.subr.bf16.mxu0 %v2413
    %3685 = vmatpush1.bf16.msra.mxu0 %v2412
    %3686 = vmatprep.subr.bf16.mxu0 %v2473
    %3687 = vmatpush2.bf16.msra.mxu0 %v2472
    %3688 = vmatprep.subr.bf16.mxu0 %v2469
    %3689 = vmatpush2.bf16.msra.mxu0 %v2468
    %3690 = vmatprep.subr.bf16.mxu0 %v2465
    %3691 = vmatpush2.bf16.msra.mxu0 %v2464
    %3692 = vmatprep.subr.bf16.mxu0 %v2461
    %3693 = vmatpush2.bf16.msra.mxu0 %v2460
    %3694 = vmatprep.subr.bf16.mxu0 %v2457
    %3695 = vmatpush2.bf16.msra.mxu0 %v2456
    %3696 = vmatprep.subr.bf16.mxu0 %v2453
    %3697 = vmatpush2.bf16.msra.mxu0 %v2452
    %3698 = vmatprep.subr.bf16.mxu0 %v2449
    %3699 = vmatpush2.bf16.msra.mxu0 %v2448
    %3700 = vmatprep.subr.bf16.mxu0 %v2445
    %3701 = vmatpush2.bf16.msra.mxu0 %v2444
    %3702 = vmatprep.mubr.bf16.mxu0 %v77
    %3703 = vmatmul.mubr.bf16.gmra.mxu0 %v76
    %v3704 = vpop.f32.mrf.mxu0
    %v3705 = vadd.f32 %v3664, %v3704
    %v3706 = vpop.f32.mrf.mxu0
    %v3707 = vadd.f32 %v3666, %v3706
    %v3708 = vpop.f32.mrf.mxu0
    %v3709 = vpop.f32.mrf.mxu0
    %3710 = vdwg.mxu0
    %3711 = vmatprep.subr.bf16.mxu0 %v2505
    %3712 = vmatpush1.bf16.msra.mxu0 %v2504
    %3713 = vmatprep.subr.bf16.mxu0 %v2501
    %3714 = vmatpush1.bf16.msra.mxu0 %v2500
    %3715 = vmatprep.subr.bf16.mxu0 %v2497
    %3716 = vmatpush1.bf16.msra.mxu0 %v2496
    %3717 = vmatprep.subr.bf16.mxu0 %v2493
    %3718 = vmatpush1.bf16.msra.mxu0 %v2492
    %3719 = vmatprep.subr.bf16.mxu0 %v2489
    %3720 = vmatpush1.bf16.msra.mxu0 %v2488
    %3721 = vmatprep.subr.bf16.mxu0 %v2485
    %3722 = vmatpush1.bf16.msra.mxu0 %v2484
    %3723 = vmatprep.subr.bf16.mxu0 %v2481
    %3724 = vmatpush1.bf16.msra.mxu0 %v2480
    %3725 = vmatprep.subr.bf16.mxu0 %v2477
    %3726 = vmatpush1.bf16.msra.mxu0 %v2476
    %3727 = vmatprep.subr.bf16.mxu0 %v2537
    %3728 = vmatpush2.bf16.msra.mxu0 %v2536
    %3729 = vmatprep.subr.bf16.mxu0 %v2533
    %3730 = vmatpush2.bf16.msra.mxu0 %v2532
    %3731 = vmatprep.subr.bf16.mxu0 %v2529
    %3732 = vmatpush2.bf16.msra.mxu0 %v2528
    %3733 = vmatprep.subr.bf16.mxu0 %v2525
    %3734 = vmatpush2.bf16.msra.mxu0 %v2524
    %3735 = vmatprep.subr.bf16.mxu0 %v2521
    %3736 = vmatpush2.bf16.msra.mxu0 %v2520
    %3737 = vmatprep.subr.bf16.mxu0 %v2517
    %3738 = vmatpush2.bf16.msra.mxu0 %v2516
    %3739 = vmatprep.subr.bf16.mxu0 %v2513
    %3740 = vmatpush2.bf16.msra.mxu0 %v2512
    %3741 = vmatprep.subr.bf16.mxu0 %v2509
    %3742 = vmatpush2.bf16.msra.mxu0 %v2508
    %3743 = vmatprep.mubr.bf16.mxu0 %v79
    %3744 = vmatmul.mubr.bf16.gmra.mxu0 %v78
    %v3745 = vpop.f32.mrf.mxu0
    %v3746 = vadd.f32 %v3705, %v3745
    %v3747 = vpop.f32.mrf.mxu0
    %v3748 = vadd.f32 %v3707, %v3747
    %v3749 = vpop.f32.mrf.mxu0
    %v3750 = vpop.f32.mrf.mxu0
    %3751 = vdwg.mxu0
    %3752 = vmatprep.subr.bf16.mxu0 %v2569
    %3753 = vmatpush1.bf16.msra.mxu0 %v2568
    %3754 = vmatprep.subr.bf16.mxu0 %v2565
    %3755 = vmatpush1.bf16.msra.mxu0 %v2564
    %3756 = vmatprep.subr.bf16.mxu0 %v2561
    %3757 = vmatpush1.bf16.msra.mxu0 %v2560
    %3758 = vmatprep.subr.bf16.mxu0 %v2557
    %3759 = vmatpush1.bf16.msra.mxu0 %v2556
    %3760 = vmatprep.subr.bf16.mxu0 %v2553
    %3761 = vmatpush1.bf16.msra.mxu0 %v2552
    %3762 = vmatprep.subr.bf16.mxu0 %v2549
    %3763 = vmatpush1.bf16.msra.mxu0 %v2548
    %3764 = vmatprep.subr.bf16.mxu0 %v2545
    %3765 = vmatpush1.bf16.msra.mxu0 %v2544
    %3766 = vmatprep.subr.bf16.mxu0 %v2541
    %3767 = vmatpush1.bf16.msra.mxu0 %v2540
    %3768 = vmatprep.subr.bf16.mxu0 %v2601
    %3769 = vmatpush2.bf16.msra.mxu0 %v2600
    %3770 = vmatprep.subr.bf16.mxu0 %v2597
    %3771 = vmatpush2.bf16.msra.mxu0 %v2596
    %3772 = vmatprep.subr.bf16.mxu0 %v2593
    %3773 = vmatpush2.bf16.msra.mxu0 %v2592
    %3774 = vmatprep.subr.bf16.mxu0 %v2589
    %3775 = vmatpush2.bf16.msra.mxu0 %v2588
    %3776 = vmatprep.subr.bf16.mxu0 %v2585
    %3777 = vmatpush2.bf16.msra.mxu0 %v2584
    %3778 = vmatprep.subr.bf16.mxu0 %v2581
    %3779 = vmatpush2.bf16.msra.mxu0 %v2580
    %3780 = vmatprep.subr.bf16.mxu0 %v2577
    %3781 = vmatpush2.bf16.msra.mxu0 %v2576
    %3782 = vmatprep.subr.bf16.mxu0 %v2573
    %3783 = vmatpush2.bf16.msra.mxu0 %v2572
    %3784 = vmatprep.mubr.bf16.mxu0 %v81
    %3785 = vmatmul.mubr.bf16.gmra.mxu0 %v80
    %v3786 = vpop.f32.mrf.mxu0
    %v3787 = vadd.f32 %v3746, %v3786
    %v3788 = vpop.f32.mrf.mxu0
    %v3789 = vadd.f32 %v3748, %v3788
    %v3790 = vpop.f32.mrf.mxu0
    %v3791 = vpop.f32.mrf.mxu0
    %3792 = vdwg.mxu0
    %3793 = vmatprep.subr.bf16.mxu0 %v2633
    %3794 = vmatpush1.bf16.msra.mxu0 %v2632
    %3795 = vmatprep.subr.bf16.mxu0 %v2629
    %3796 = vmatpush1.bf16.msra.mxu0 %v2628
    %3797 = vmatprep.subr.bf16.mxu0 %v2625
    %3798 = vmatpush1.bf16.msra.mxu0 %v2624
    %3799 = vmatprep.subr.bf16.mxu0 %v2621
    %3800 = vmatpush1.bf16.msra.mxu0 %v2620
    %3801 = vmatprep.subr.bf16.mxu0 %v2617
    %3802 = vmatpush1.bf16.msra.mxu0 %v2616
    %3803 = vmatprep.subr.bf16.mxu0 %v2613
    %3804 = vmatpush1.bf16.msra.mxu0 %v2612
    %3805 = vmatprep.subr.bf16.mxu0 %v2609
    %3806 = vmatpush1.bf16.msra.mxu0 %v2608
    %3807 = vmatprep.subr.bf16.mxu0 %v2605
    %3808 = vmatpush1.bf16.msra.mxu0 %v2604
    %3809 = vmatprep.subr.bf16.mxu0 %v2665
    %3810 = vmatpush2.bf16.msra.mxu0 %v2664
    %3811 = vmatprep.subr.bf16.mxu0 %v2661
    %3812 = vmatpush2.bf16.msra.mxu0 %v2660
    %3813 = vmatprep.subr.bf16.mxu0 %v2657
    %3814 = vmatpush2.bf16.msra.mxu0 %v2656
    %3815 = vmatprep.subr.bf16.mxu0 %v2653
    %3816 = vmatpush2.bf16.msra.mxu0 %v2652
    %3817 = vmatprep.subr.bf16.mxu0 %v2649
    %3818 = vmatpush2.bf16.msra.mxu0 %v2648
    %3819 = vmatprep.subr.bf16.mxu0 %v2645
    %3820 = vmatpush2.bf16.msra.mxu0 %v2644
    %3821 = vmatprep.subr.bf16.mxu0 %v2641
    %3822 = vmatpush2.bf16.msra.mxu0 %v2640
    %3823 = vmatprep.subr.bf16.mxu0 %v2637
    %3824 = vmatpush2.bf16.msra.mxu0 %v2636
    %3825 = vmatprep.mubr.bf16.mxu0 %v83
    %3826 = vmatmul.mubr.bf16.gmra.mxu0 %v82
    %v3827 = vpop.f32.mrf.mxu0
    %v3828 = vadd.f32 %v3787, %v3827
    %v3829 = vpop.f32.mrf.mxu0
    %v3830 = vadd.f32 %v3789, %v3829
    %v3831 = vpop.f32.mrf.mxu0
    %v3832 = vpop.f32.mrf.mxu0
    %3833 = vdwg.mxu0
    %v3834 = vmul.f32 %v3500, %v3500
    %v3835 = vmul.f32 %v3502, %v3502
    %v3836 = vmul.f32 %v3828, %v3828
    %v3837 = vmul.f32 %v3830, %v3830
    %v3838 = vadd.f32 %v3834, %v3835
    %v3839 = vadd.f32 %v3838, %v3836
    %v3840 = vadd.f32 %v3839, %v3837
    %3841 = vadd.xlane.f32.xlu0 %v3840
    %v3842 = vpop.xlane.xlu0 %3841
    %v3843 = vrsqrt.pop %v3842
    %v3844 = vmul.f32 %v3842, %v3843
    %vm3845 = vcmp.eq.f32.partialorder %v3842, inf
    %v3846 = vsel %vm3845, %v3842, %v3844
    %vm3847 = vcmp.eq.f32.partialorder %v3842, 0.0
    %v3848 = vand.u32 %v3842, 2147483648
    %v3849 = vsel %vm3847, %v3848, %v3846
    %v3850 = vmax.f32 %v3849, 1e-12
    %v3851 = vrcp.pop %v3850
    %v3852 = vmul.f32 %v3500, %v3851
    %v3853 = vmul.f32 %v3502, %v3851
    %v3854 = vmul.f32 %v3828, %v3851
    %v3855 = vmul.f32 %v3830, %v3851
    %3856 = vst [vmem:[#allocation8] sm:$0xff] %v3852
    %3857 = vst [vmem:[#allocation8 + $0x8] sm:$0xff] %v3853
    %3858 = vst [vmem:[#allocation8 + $0x10] sm:$0xff] %v3854
    %3859 = vst [vmem:[#allocation8 + $0x18] sm:$0xff] %v3855
    // Predicated region
    $region26: #{tpu_custom_call.1} parent=1 // pred_check
      _
    $region27: #{tpu_custom_call.1} parent=1 // pred_check_branch
      %3861 = sbr.rel (0) target = $region29
    $region28: #{tpu_custom_call.1} parent=1 // pred_region
      %s3863 = ssub.s32 512, 512
      %3864 = vsyncadd [#allocation4], %s3863
      %s3866 = sshll.u32 [#allocation8], 4
      %s3867 = int_to_ptr.vmem [resolvable:$true] %s3866
      %3869 = dma.vmem_to_hbm [thread:$0]  %s3867, 512, %s3, [#allocation4]
    $region29: #{tpu_custom_call.1} parent=1 // pred_fallthru
      _
    // Predicated region
    $region30: #{tpu_custom_call.1} parent=1 // pred_check
      _
    $region31: #{tpu_custom_call.1} parent=1 // pred_check_branch
      %3871 = sbr.rel (0) target = $region33
    $region32: #{tpu_custom_call.1} parent=1 // pred_region
      %3872 = dma.done [#allocation4], 512
    $region33: #{tpu_custom_call.1} parent=1 // pred_fallthru
      _
    %3873 = vsyncpa [#allocation3], 1
    %3874 = vsyncpa [#allocation6], 1
    %3875 = vsyncpa [#allocation4], 1

</llo_original>
